<compile_context>
chip_gen: v7x
topology: tpu7x:2x2x1
jax: 0.10.0
libtpu: 0.0.40
codegen_flags: <defaults>
</compile_context>

<pallas_src>
import jax
import jax.numpy as jnp
from jax.experimental import pallas as pl
from jax.experimental.pallas import tpu as pltpu

# ---- small, module-consistent configuration -------------------------------
N_EMBD = 128      # n_embd (module uses 256; kept small but lane-dense = 128)
NUM_HEADS = 4     # num_heads
HEAD_SIZE = 32    # head_size; num_heads * head_size == n_embd (required by proj)
BLOCK_SIZE = 16   # block_size (>= T)
B = 2             # batch
T = 16            # sequence length
assert NUM_HEADS * HEAD_SIZE == N_EMBD
assert T <= BLOCK_SIZE


# ---------------------------------------------------------------------------
# Pallas kernel: full multi-head attention for the whole batch, one step.
# ---------------------------------------------------------------------------
def mha_kernel(x_ref, wqkv_ref, wo_ref, bo_ref, bias_ref, o_ref):
    """
    x_ref    : (B*T, C)     activations, lane-dense (C = 128)
    wqkv_ref : (H, C, 3*D)  per-head fused [Wq | Wk | Wv]  (no bias)
    wo_ref   : (H, D, C)    output projection, split per head
    bo_ref   : (1, C)       output projection bias
    bias_ref : (B*T, B*T)   additive mask: 0 where attention is allowed
                            (same batch element AND causal), -1e30 otherwise
    o_ref    : (B*T, C)     output
    """
    n_rows, n_embd = x_ref.shape
    num_heads = wqkv_ref.shape[0]
    head_size = wo_ref.shape[1]
    scale = 1.0 / (float(n_embd) ** 0.5)        # matches PyTorch: C ** (-0.5)

    x = x_ref[...]
    # One batched projection for all heads: (H, BT, C) @ (H, C, 3D) -> (H, BT, 3D)
    xb = jnp.broadcast_to(x[None], (num_heads, n_rows, n_embd))
    qkv = jnp.einsum('hnc,hcf->hnf', xb, wqkv_ref[...],
                     preferred_element_type=jnp.float32)
    q = qkv[..., :head_size]
    k = qkv[..., head_size:2 * head_size]
    v = qkv[..., 2 * head_size:]

    # Scores for all heads at once: (H, BT, BT)
    s = jnp.einsum('hqd,hkd->hqk', q, k,
                   preferred_element_type=jnp.float32) * scale
    s = s + bias_ref[...][None]                  # block-diagonal causal mask

    # Softmax (attention dropout is identity in inference mode)
    s = s - jnp.max(s, axis=-1, keepdims=True)
    p = jnp.exp(s)
    p = p * pl.reciprocal(jnp.sum(p, axis=-1, keepdims=True), approx=True)

    # Weighted values: (H, BT, D)
    attn = jnp.einsum('hqk,hkd->hqd', p, v, preferred_element_type=jnp.float32)

    # concat_h(attn_h) @ Wo  ==  sum_h attn_h @ Wo[h*D:(h+1)*D, :]
    y = jnp.einsum('hnd,hdc->hnc', attn, wo_ref[...],
                   preferred_element_type=jnp.float32)        # (H, BT, C)
    o_ref[...] = jnp.sum(y, axis=0) + bo_ref[...]             # proj dropout = identity


def multi_head_attention(x, wqkv3, wo3, bo, mask_bias):
    """x: (B, T, C) float32. Returns (B, T, C)."""
    Bsz, Tlen, C = x.shape
    x2d = x.reshape(Bsz * Tlen, C)               # lane-dense (B*T, 128)
    vmem = pltpu.MemorySpace.VMEM
    out2d = pl.pallas_call(
        mha_kernel,
        out_shape=jax.ShapeDtypeStruct((Bsz * Tlen, C), jnp.float32),
        in_specs=[pl.BlockSpec(memory_space=vmem)] * 5,
        out_specs=pl.BlockSpec(memory_space=vmem),
    )(x2d, wqkv3, wo3, bo, mask_bias)
    return out2d.reshape(Bsz, Tlen, C)


# ---------------------------------------------------------------------------
# Host-side helpers (weight packing, mask precompute).
# ---------------------------------------------------------------------------
def build_mask_bias(Bsz, Tlen):
    """Additive attention bias over the flattened (B*T) axis: 0 where the key
    is in the same batch element and not in the future, else -1e30."""
    idx = jnp.arange(Bsz * Tlen)
    same_batch = (idx[:, None] // Tlen) == (idx[None, :] // Tlen)
    causal = idx[None, :] <= idx[:, None]
    return jnp.where(same_batch & causal, 0.0, -1e30).astype(jnp.float32)


def pack_params(wq, wk, wv, wo, bo):
    wqkv3 = jnp.concatenate([wq, wk, wv], axis=-1)            # (H, C, 3D)
    wo3 = wo.reshape(NUM_HEADS, HEAD_SIZE, N_EMBD)            # (H, D, C)
    return wqkv3, wo3, bo


# ---------------------------------------------------------------------------
# Pure-JAX reference (head-by-head, mirrors the PyTorch module) for checking.
# ---------------------------------------------------------------------------
def mha_ref(x, wq, wk, wv, wo, bo):
    Bsz, Tlen, C = x.shape
    scale = float(C) ** (-0.5)
    tril = jnp.tril(jnp.ones((Tlen, Tlen), dtype=bool))
    heads = []
    for h in range(NUM_HEADS):
        q = x @ wq[h]
        k = x @ wk[h]
        v = x @ wv[h]
        s = jnp.einsum('btd,bsd->bts', q, k) * scale
        s = jnp.where(tril[None], s, -jnp.inf)
        p = jax.nn.softmax(s, axis=-1)
        heads.append(jnp.einsum('bts,bsd->btd', p, v))
    cat = jnp.concatenate(heads, axis=-1)                     # (B, T, C)
    return cat @ wo + bo


def init_params(key):
    ks = jax.random.split(key, 5)
    std = 0.02
    wq = jax.random.normal(ks[0], (NUM_HEADS, N_EMBD, HEAD_SIZE), jnp.float32) * std
    wk = jax.random.normal(ks[1], (NUM_HEADS, N_EMBD, HEAD_SIZE), jnp.float32) * std
    wv = jax.random.normal(ks[2], (NUM_HEADS, N_EMBD, HEAD_SIZE), jnp.float32) * std
    wo = jax.random.normal(ks[3], (N_EMBD, N_EMBD), jnp.float32) * std
    bo = jax.random.normal(ks[4], (1, N_EMBD), jnp.float32) * std
    return wq, wk, wv, wo, bo


if __name__ == "__main__":
    key = jax.random.PRNGKey(0)
    kx, kp = jax.random.split(key)
    x = jax.random.normal(kx, (B, T, N_EMBD), jnp.float32)
    wq, wk, wv, wo, bo = init_params(kp)

    wqkv3, wo3, bo_p = pack_params(wq, wk, wv, wo, bo)
    mask_bias = build_mask_bias(B, T)

    out = multi_head_attention(x, wqkv3, wo3, bo_p, mask_bias)
    out = jax.block_until_ready(out)

    ref = mha_ref(x, wq, wk, wv, wo, bo)
    assert out.shape == (B, T, N_EMBD)
    err = float(jnp.max(jnp.abs(out - ref)))
    assert jnp.allclose(out, ref, atol=2e-3, rtol=2e-3), f"max abs err {err}"
    print("KERNEL_OK")
</pallas_src>

<mosaic_0001>
module attributes {stable_mosaic.version = 11 : i64} {
  func.func @mha_kernel(%arg0: memref<32x128xf32, #tpu.memory_space<vmem>>, %arg1: memref<4x128x96xf32, #tpu.memory_space<vmem>>, %arg2: memref<4x32x128xf32, #tpu.memory_space<vmem>>, %arg3: memref<1x128xf32, #tpu.memory_space<vmem>>, %arg4: memref<32x32xf32, #tpu.memory_space<vmem>>, %arg5: memref<32x128xf32, #tpu.memory_space<vmem>>) attributes {dimension_semantics = [], scalar_prefetch = 0 : i64, scratch_operands = 0 : i64, tpu.core_type = #tpu.core_type<tc>} {
    %c0 = arith.constant 0 : index
    %c0_0 = arith.constant 0 : index
    %0 = vector.load %arg0[%c0, %c0_0] : memref<32x128xf32, #tpu.memory_space<vmem>>, vector<32x128xf32>
    %1 = vector.shape_cast %0 : vector<32x128xf32> to vector<1x32x128xf32>
    %2 = vector.shape_cast %1 : vector<1x32x128xf32> to vector<1x32x128xf32>
    %3 = vector.broadcast %2 : vector<1x32x128xf32> to vector<4x32x128xf32>
    %c0_1 = arith.constant 0 : index
    %c0_2 = arith.constant 0 : index
    %c0_3 = arith.constant 0 : index
    %4 = vector.load %arg1[%c0_1, %c0_2, %c0_3] : memref<4x128x96xf32, #tpu.memory_space<vmem>>, vector<4x128x96xf32>
    "tpu.trace_start"() <{level = 10 : i32, message = "hnc,hcf->hnf"}> : () -> ()
    %cst = arith.constant dense<0.000000e+00> : vector<4x32x96xf32>
    %5 = tpu.matmul %3, %4, %cst {dimension_numbers = #tpu.dot_dimension_numbers<[2], [1], [1], [2], [0, 0, 0, 1, 1, 2], [0], [0]>} : vector<4x32x128xf32>, vector<4x128x96xf32>, vector<4x32x96xf32> -> vector<4x32x96xf32>
    "tpu.trace_stop"() : () -> ()
    %6 = vector.extract_strided_slice %5 {offsets = [0, 0, 0], sizes = [4, 32, 32], strides = [1, 1, 1]} : vector<4x32x96xf32> to vector<4x32x32xf32>
    %7 = vector.extract_strided_slice %5 {offsets = [0, 0, 32], sizes = [4, 32, 32], strides = [1, 1, 1]} : vector<4x32x96xf32> to vector<4x32x32xf32>
    %8 = vector.extract_strided_slice %5 {offsets = [0, 0, 64], sizes = [4, 32, 32], strides = [1, 1, 1]} : vector<4x32x96xf32> to vector<4x32x32xf32>
    "tpu.trace_start"() <{level = 10 : i32, message = "hqd,hkd->hqk"}> : () -> ()
    %cst_4 = arith.constant dense<0.000000e+00> : vector<4x32x32xf32>
    %9 = tpu.matmul %6, %7, %cst_4 {dimension_numbers = #tpu.dot_dimension_numbers<[2], [2], [1], [1], [0, 0, 0, 1, 1, 1], [0], [0]>} : vector<4x32x32xf32>, vector<4x32x32xf32>, vector<4x32x32xf32> -> vector<4x32x32xf32>
    "tpu.trace_stop"() : () -> ()
    %cst_5 = arith.constant 0.0883883461 : f32
    %10 = vector.broadcast %cst_5 : f32 to vector<4x32x32xf32>
    %11 = arith.mulf %9, %10 : vector<4x32x32xf32>
    %c0_6 = arith.constant 0 : index
    %c0_7 = arith.constant 0 : index
    %12 = vector.load %arg4[%c0_6, %c0_7] : memref<32x32xf32, #tpu.memory_space<vmem>>, vector<32x32xf32>
    %13 = vector.shape_cast %12 : vector<32x32xf32> to vector<1x32x32xf32>
    %14 = vector.broadcast %13 : vector<1x32x32xf32> to vector<4x32x32xf32>
    %15 = arith.addf %11, %14 : vector<4x32x32xf32>
    %cst_8 = arith.constant dense<0xFF800000> : vector<4x32xf32>
    %16 = vector.multi_reduction <maximumf>, %15, %cst_8 [2] : vector<4x32x32xf32> to vector<4x32xf32>
    %17 = vector.shape_cast %16 : vector<4x32xf32> to vector<4x32x1xf32>
    %18 = vector.broadcast %17 : vector<4x32x1xf32> to vector<4x32x32xf32>
    %19 = arith.subf %15, %18 : vector<4x32x32xf32>
    %20 = math.exp %19 : vector<4x32x32xf32>
    %cst_9 = arith.constant dense<0.000000e+00> : vector<4x32xf32>
    %21 = vector.multi_reduction <add>, %20, %cst_9 [2] : vector<4x32x32xf32> to vector<4x32xf32>
    %22 = vector.shape_cast %21 : vector<4x32xf32> to vector<4x32x1xf32>
    %23 = tpu.reciprocal %22 {approx = true} : vector<4x32x1xf32> -> vector<4x32x1xf32>
    %24 = vector.broadcast %23 : vector<4x32x1xf32> to vector<4x32x32xf32>
    %25 = arith.mulf %20, %24 : vector<4x32x32xf32>
    "tpu.trace_start"() <{level = 10 : i32, message = "hqk,hkd->hqd"}> : () -> ()
    %cst_10 = arith.constant dense<0.000000e+00> : vector<4x32x32xf32>
    %26 = tpu.matmul %25, %8, %cst_10 {dimension_numbers = #tpu.dot_dimension_numbers<[2], [1], [1], [2], [0, 0, 0, 1, 1, 2], [0], [0]>} : vector<4x32x32xf32>, vector<4x32x32xf32>, vector<4x32x32xf32> -> vector<4x32x32xf32>
    "tpu.trace_stop"() : () -> ()
    %c0_11 = arith.constant 0 : index
    %c0_12 = arith.constant 0 : index
    %c0_13 = arith.constant 0 : index
    %27 = vector.load %arg2[%c0_11, %c0_12, %c0_13] : memref<4x32x128xf32, #tpu.memory_space<vmem>>, vector<4x32x128xf32>
    "tpu.trace_start"() <{level = 10 : i32, message = "hnd,hdc->hnc"}> : () -> ()
    %cst_14 = arith.constant dense<0.000000e+00> : vector<4x32x128xf32>
    %28 = tpu.matmul %26, %27, %cst_14 {dimension_numbers = #tpu.dot_dimension_numbers<[2], [1], [1], [2], [0, 0, 0, 1, 1, 2], [0], [0]>} : vector<4x32x32xf32>, vector<4x32x128xf32>, vector<4x32x128xf32> -> vector<4x32x128xf32>
    "tpu.trace_stop"() : () -> ()
    %cst_15 = arith.constant dense<0.000000e+00> : vector<32x128xf32>
    %29 = vector.multi_reduction <add>, %28, %cst_15 [0] : vector<4x32x128xf32> to vector<32x128xf32>
    %c0_16 = arith.constant 0 : index
    %c0_17 = arith.constant 0 : index
    %30 = vector.load %arg3[%c0_16, %c0_17] : memref<1x128xf32, #tpu.memory_space<vmem>>, vector<1x128xf32>
    %31 = vector.broadcast %30 : vector<1x128xf32> to vector<32x128xf32>
    %32 = arith.addf %29, %31 : vector<32x128xf32>
    %c0_18 = arith.constant 0 : index
    %c0_19 = arith.constant 0 : index
    %33 = vector.load %arg5[%c0_18, %c0_19] : memref<32x128xf32, #tpu.memory_space<vmem>>, vector<32x128xf32>
    tpu.vector_store %arg5[%c0_18, %c0_19], %32 {strides = array<i32>} : memref<32x128xf32, #tpu.memory_space<vmem>>, vector<32x128xf32>,
    return
  }
}

</mosaic_0001>

<llo_original>
// kernel: tpu_custom_call.1
$region0: #{tpu_custom_call.1}
  #allocation0 [shape = 'u32[]', space=smem, size = 0x4, offset = 0x4, fixed_abs, tag = 'smem constant byte address 0x4 - core index']
  #allocation1 [shape = 'u32[144,128]{1,0:T(1,128)}', space=vmem, size = 0x12000, scoped, tag = 'internal scratch']
  %s0 = inlined_call_operand.vmem [shape: f32[32,128], index: 0, kind: input, shape index: {}]
  %s1 = inlined_call_operand.vmem [shape: f32[4,128,96], index: 1, kind: input, shape index: {}]
  %s2 = inlined_call_operand.vmem [shape: f32[4,32,128], index: 2, kind: input, shape index: {}]
  %s3 = inlined_call_operand.vmem [shape: f32[1,128], index: 3, kind: input, shape index: {}]
  %s4 = inlined_call_operand.vmem [shape: f32[32,32], index: 4, kind: input, shape index: {}]
  %s5 = inlined_call_operand.hbm [shape: f32[32,128], index: 5, kind: output, shape index: {}]
  %s6 = sld [smem:[#allocation0]]
  $region30: #{tpu_custom_call.1} parent=0
    _
  %s8 = ssub.s32 1, %s6
  %s9 = scalar_select 0, %s8, %s6
  $region1: #{tpu_custom_call.1} parent=0
    #allocation2 [shape = 'u8[16384]{0}', space=vmem, size = 0x4000, scoped, tag = 'output window, operand 0, single buffered']
    #allocation3 [shape = 's32[1]{0}', space=sflag, size = 0x4, scoped, tag = 'scoped memory for tpu_custom_call.1']
    %10 = vsyncpa [#allocation3], 0
    // Predicated region
    $region2: #{tpu_custom_call.1} parent=1 // pred_check
      _
    $region3: #{tpu_custom_call.1} parent=1 // pred_check_branch
      %12 = sbr.rel (0) target = $region5
    $region4: #{tpu_custom_call.1} parent=1 // pred_region
      _
    $region5: #{tpu_custom_call.1} parent=1 // pred_fallthru
      _
    // Predicated region
    $region6: #{tpu_custom_call.1} parent=1 // pred_check
      _
    $region7: #{tpu_custom_call.1} parent=1 // pred_check_branch
      %14 = sbr.rel (0) target = $region9
    $region8: #{tpu_custom_call.1} parent=1 // pred_region
      _
    $region9: #{tpu_custom_call.1} parent=1 // pred_fallthru
      _
    // Predicated region
    $region10: #{tpu_custom_call.1} parent=1 // pred_check
      _
    $region11: #{tpu_custom_call.1} parent=1 // pred_check_branch
      %16 = sbr.rel (0) target = $region13
    $region12: #{tpu_custom_call.1} parent=1 // pred_region
      _
    $region13: #{tpu_custom_call.1} parent=1 // pred_fallthru
      _
    // Predicated region
    $region14: #{tpu_custom_call.1} parent=1 // pred_check
      _
    $region15: #{tpu_custom_call.1} parent=1 // pred_check_branch
      %18 = sbr.rel (0) target = $region17
    $region16: #{tpu_custom_call.1} parent=1 // pred_region
      _
    $region17: #{tpu_custom_call.1} parent=1 // pred_fallthru
      _
    // Predicated region
    $region18: #{tpu_custom_call.1} parent=1 // pred_check
      _
    $region19: #{tpu_custom_call.1} parent=1 // pred_check_branch
      %20 = sbr.rel (0) target = $region21
    $region20: #{tpu_custom_call.1} parent=1 // pred_region
      _
    $region21: #{tpu_custom_call.1} parent=1 // pred_fallthru
      _
    %v21 = vld [vmem:[%s0] sm:$0xff]
    %v22 = vld [vmem:[%s0 + $0x8] sm:$0xff]
    %v23 = vld [vmem:[%s0 + $0x10] sm:$0xff]
    %v24 = vld [vmem:[%s0 + $0x18] sm:$0xff]
    %v25 = vld [vmem:[%s1] sm:$0xff]
    %v26 = vld [vmem:[%s1 + $0x8] sm:$0xff]
    %v27 = vld [vmem:[%s1 + $0x10] sm:$0xff]
    %v28 = vld [vmem:[%s1 + $0x18] sm:$0xff]
    %v29 = vld [vmem:[%s1 + $0x20] sm:$0xff]
    %v30 = vld [vmem:[%s1 + $0x28] sm:$0xff]
    %v31 = vld [vmem:[%s1 + $0x30] sm:$0xff]
    %v32 = vld [vmem:[%s1 + $0x38] sm:$0xff]
    %v33 = vld [vmem:[%s1 + $0x40] sm:$0xff]
    %v34 = vld [vmem:[%s1 + $0x48] sm:$0xff]
    %v35 = vld [vmem:[%s1 + $0x50] sm:$0xff]
    %v36 = vld [vmem:[%s1 + $0x58] sm:$0xff]
    %v37 = vld [vmem:[%s1 + $0x60] sm:$0xff]
    %v38 = vld [vmem:[%s1 + $0x68] sm:$0xff]
    %v39 = vld [vmem:[%s1 + $0x70] sm:$0xff]
    %v40 = vld [vmem:[%s1 + $0x78] sm:$0xff]
    %v41 = vld [vmem:[%s1 + $0x80] sm:$0xff]
    %v42 = vld [vmem:[%s1 + $0x88] sm:$0xff]
    %v43 = vld [vmem:[%s1 + $0x90] sm:$0xff]
    %v44 = vld [vmem:[%s1 + $0x98] sm:$0xff]
    %v45 = vld [vmem:[%s1 + $0xa0] sm:$0xff]
    %v46 = vld [vmem:[%s1 + $0xa8] sm:$0xff]
    %v47 = vld [vmem:[%s1 + $0xb0] sm:$0xff]
    %v48 = vld [vmem:[%s1 + $0xb8] sm:$0xff]
    %v49 = vld [vmem:[%s1 + $0xc0] sm:$0xff]
    %v50 = vld [vmem:[%s1 + $0xc8] sm:$0xff]
    %v51 = vld [vmem:[%s1 + $0xd0] sm:$0xff]
    %v52 = vld [vmem:[%s1 + $0xd8] sm:$0xff]
    %v53 = vld [vmem:[%s1 + $0xe0] sm:$0xff]
    %v54 = vld [vmem:[%s1 + $0xe8] sm:$0xff]
    %v55 = vld [vmem:[%s1 + $0xf0] sm:$0xff]
    %v56 = vld [vmem:[%s1 + $0xf8] sm:$0xff]
    %v57 = vld [vmem:[%s1 + $0x100] sm:$0xff]
    %v58 = vld [vmem:[%s1 + $0x108] sm:$0xff]
    %v59 = vld [vmem:[%s1 + $0x110] sm:$0xff]
    %v60 = vld [vmem:[%s1 + $0x118] sm:$0xff]
    %v61 = vld [vmem:[%s1 + $0x120] sm:$0xff]
    %v62 = vld [vmem:[%s1 + $0x128] sm:$0xff]
    %v63 = vld [vmem:[%s1 + $0x130] sm:$0xff]
    %v64 = vld [vmem:[%s1 + $0x138] sm:$0xff]
    %v65 = vld [vmem:[%s1 + $0x140] sm:$0xff]
    %v66 = vld [vmem:[%s1 + $0x148] sm:$0xff]
    %v67 = vld [vmem:[%s1 + $0x150] sm:$0xff]
    %v68 = vld [vmem:[%s1 + $0x158] sm:$0xff]
    %v69 = vld [vmem:[%s1 + $0x160] sm:$0xff]
    %v70 = vld [vmem:[%s1 + $0x168] sm:$0xff]
    %v71 = vld [vmem:[%s1 + $0x170] sm:$0xff]
    %v72 = vld [vmem:[%s1 + $0x178] sm:$0xff]
    %v73 = vld [vmem:[%s1 + $0x180] sm:$0xff]
    %v74 = vld [vmem:[%s1 + $0x188] sm:$0xff]
    %v75 = vld [vmem:[%s1 + $0x190] sm:$0xff]
    %v76 = vld [vmem:[%s1 + $0x198] sm:$0xff]
    %v77 = vld [vmem:[%s1 + $0x1a0] sm:$0xff]
    %v78 = vld [vmem:[%s1 + $0x1a8] sm:$0xff]
    %v79 = vld [vmem:[%s1 + $0x1b0] sm:$0xff]
    %v80 = vld [vmem:[%s1 + $0x1b8] sm:$0xff]
    %v81 = vld [vmem:[%s1 + $0x1c0] sm:$0xff]
    %v82 = vld [vmem:[%s1 + $0x1c8] sm:$0xff]
    %v83 = vld [vmem:[%s1 + $0x1d0] sm:$0xff]
    %v84 = vld [vmem:[%s1 + $0x1d8] sm:$0xff]
    %v85 = vld [vmem:[%s1 + $0x1e0] sm:$0xff]
    %v86 = vld [vmem:[%s1 + $0x1e8] sm:$0xff]
    %v87 = vld [vmem:[%s1 + $0x1f0] sm:$0xff]
    %v88 = vld [vmem:[%s1 + $0x1f8] sm:$0xff]
    %89 = vmatprep.subr.mxu0 0.0
    %90 = vmatpush1.msra.mxu0 %v25
    %91 = vmatprep.subr.mxu0 0.0
    %92 = vmatpush1.msra.mxu0 %v26
    %93 = vmatprep.subr.mxu0 0.0
    %94 = vmatpush1.msra.mxu0 %v27
    %95 = vmatprep.subr.mxu0 0.0
    %96 = vmatpush1.msra.mxu0 %v28
    %97 = vmatprep.subr.mxu0 0.0
    %98 = vmatpush1.msra.mxu0 %v29
    %99 = vmatprep.subr.mxu0 0.0
    %100 = vmatpush1.msra.mxu0 %v30
    %101 = vmatprep.subr.mxu0 0.0
    %102 = vmatpush1.msra.mxu0 %v31
    %103 = vmatprep.subr.mxu0 0.0
    %104 = vmatpush1.msra.mxu0 %v32
    %105 = vmatprep.subr.mxu0 0.0
    %106 = vmatpush1.msra.mxu0 %v33
    %107 = vmatprep.subr.mxu0 0.0
    %108 = vmatpush1.msra.mxu0 %v34
    %109 = vmatprep.subr.mxu0 0.0
    %110 = vmatpush1.msra.mxu0 %v35
    %111 = vmatprep.subr.mxu0 0.0
    %112 = vmatpush1.msra.mxu0 %v36
    %113 = vmatprep.subr.mxu0 0.0
    %114 = vmatpush1.msra.mxu0 %v37
    %115 = vmatprep.subr.mxu0 0.0
    %116 = vmatpush1.msra.mxu0 %v38
    %117 = vmatprep.subr.mxu0 0.0
    %118 = vmatpush1.msra.mxu0 %v39
    %119 = vmatprep.subr.mxu0 0.0
    %120 = vmatpush1.msra.mxu0 %v40
    %121 = vmatprep.subr.mxu0 0.0
    %122 = vmatpush1.msra.mxu0 0.0
    %123 = vmatprep.subr.mxu0 0.0
    %124 = vmatpush1.msra.mxu0 0.0
    %125 = vmatprep.subr.mxu0 0.0
    %126 = vmatpush1.msra.mxu0 0.0
    %127 = vmatprep.subr.mxu0 0.0
    %128 = vmatpush1.msra.mxu0 0.0
    %129 = vmatprep.subr.mxu0 0.0
    %130 = vmatpush1.msra.mxu0 0.0
    %131 = vmatprep.subr.mxu0 0.0
    %132 = vmatpush1.msra.mxu0 0.0
    %133 = vmatprep.subr.mxu0 0.0
    %134 = vmatpush1.msra.mxu0 0.0
    %135 = vmatprep.subr.mxu0 0.0
    %136 = vmatpush1.msra.mxu0 0.0
    %137 = vmatprep.subr.mxu0 0.0
    %138 = vmatpush1.msra.mxu0 0.0
    %139 = vmatprep.subr.mxu0 0.0
    %140 = vmatpush1.msra.mxu0 0.0
    %141 = vmatprep.subr.mxu0 0.0
    %142 = vmatpush1.msra.mxu0 0.0
    %143 = vmatprep.subr.mxu0 0.0
    %144 = vmatpush1.msra.mxu0 0.0
    %145 = vmatprep.subr.mxu0 0.0
    %146 = vmatpush1.msra.mxu0 0.0
    %147 = vmatprep.subr.mxu0 0.0
    %148 = vmatpush1.msra.mxu0 0.0
    %149 = vmatprep.subr.mxu0 0.0
    %150 = vmatpush1.msra.mxu0 0.0
    %151 = vmatprep.subr.mxu0 0.0
    %152 = vmatpush1.msra.mxu0 0.0
    %153 = vmatprep.mubr.f32.mxu0 0.0
    %154 = vmatmul.mubr.f32.gmra.mrb[0].mxu0 %v21
    %v155 = vpop.f32.mrb[0].mxu0
    %v156 = vadd.f32 0.0, %v155
    %v157 = vpop.f32.mrb[0].mxu0
    %158 = vmatprep.mubr.f32.mxu0 0.0
    %159 = vmatmul.mubr.f32.gmra.mrb[0].mxu0 %v22
    %v160 = vpop.f32.mrb[0].mxu0
    %v161 = vadd.f32 0.0, %v160
    %v162 = vpop.f32.mrb[0].mxu0
    %163 = vmatprep.mubr.f32.mxu0 0.0
    %164 = vmatmul.mubr.f32.gmra.mrb[0].mxu0 %v23
    %v165 = vpop.f32.mrb[0].mxu0
    %v166 = vadd.f32 0.0, %v165
    %v167 = vpop.f32.mrb[0].mxu0
    %168 = vmatprep.mubr.f32.mxu0 0.0
    %169 = vmatmul.mubr.f32.gmra.mrb[0].mxu0 %v24
    %v170 = vpop.f32.mrb[0].mxu0
    %v171 = vadd.f32 0.0, %v170
    %v172 = vpop.f32.mrb[0].mxu0
    %173 = vdwg.mxu0
    %174 = vmatprep.subr.mxu0 0.0
    %175 = vmatpush1.msra.mxu0 %v41
    %176 = vmatprep.subr.mxu0 0.0
    %177 = vmatpush1.msra.mxu0 %v42
    %178 = vmatprep.subr.mxu0 0.0
    %179 = vmatpush1.msra.mxu0 %v43
    %180 = vmatprep.subr.mxu0 0.0
    %181 = vmatpush1.msra.mxu0 %v44
    %182 = vmatprep.subr.mxu0 0.0
    %183 = vmatpush1.msra.mxu0 %v45
    %184 = vmatprep.subr.mxu0 0.0
    %185 = vmatpush1.msra.mxu0 %v46
    %186 = vmatprep.subr.mxu0 0.0
    %187 = vmatpush1.msra.mxu0 %v47
    %188 = vmatprep.subr.mxu0 0.0
    %189 = vmatpush1.msra.mxu0 %v48
    %190 = vmatprep.subr.mxu0 0.0
    %191 = vmatpush1.msra.mxu0 %v49
    %192 = vmatprep.subr.mxu0 0.0
    %193 = vmatpush1.msra.mxu0 %v50
    %194 = vmatprep.subr.mxu0 0.0
    %195 = vmatpush1.msra.mxu0 %v51
    %196 = vmatprep.subr.mxu0 0.0
    %197 = vmatpush1.msra.mxu0 %v52
    %198 = vmatprep.subr.mxu0 0.0
    %199 = vmatpush1.msra.mxu0 %v53
    %200 = vmatprep.subr.mxu0 0.0
    %201 = vmatpush1.msra.mxu0 %v54
    %202 = vmatprep.subr.mxu0 0.0
    %203 = vmatpush1.msra.mxu0 %v55
    %204 = vmatprep.subr.mxu0 0.0
    %205 = vmatpush1.msra.mxu0 %v56
    %206 = vmatprep.subr.mxu0 0.0
    %207 = vmatpush1.msra.mxu0 0.0
    %208 = vmatprep.subr.mxu0 0.0
    %209 = vmatpush1.msra.mxu0 0.0
    %210 = vmatprep.subr.mxu0 0.0
    %211 = vmatpush1.msra.mxu0 0.0
    %212 = vmatprep.subr.mxu0 0.0
    %213 = vmatpush1.msra.mxu0 0.0
    %214 = vmatprep.subr.mxu0 0.0
    %215 = vmatpush1.msra.mxu0 0.0
    %216 = vmatprep.subr.mxu0 0.0
    %217 = vmatpush1.msra.mxu0 0.0
    %218 = vmatprep.subr.mxu0 0.0
    %219 = vmatpush1.msra.mxu0 0.0
    %220 = vmatprep.subr.mxu0 0.0
    %221 = vmatpush1.msra.mxu0 0.0
    %222 = vmatprep.subr.mxu0 0.0
    %223 = vmatpush1.msra.mxu0 0.0
    %224 = vmatprep.subr.mxu0 0.0
    %225 = vmatpush1.msra.mxu0 0.0
    %226 = vmatprep.subr.mxu0 0.0
    %227 = vmatpush1.msra.mxu0 0.0
    %228 = vmatprep.subr.mxu0 0.0
    %229 = vmatpush1.msra.mxu0 0.0
    %230 = vmatprep.subr.mxu0 0.0
    %231 = vmatpush1.msra.mxu0 0.0
    %232 = vmatprep.subr.mxu0 0.0
    %233 = vmatpush1.msra.mxu0 0.0
    %234 = vmatprep.subr.mxu0 0.0
    %235 = vmatpush1.msra.mxu0 0.0
    %236 = vmatprep.subr.mxu0 0.0
    %237 = vmatpush1.msra.mxu0 0.0
    %238 = vmatprep.mubr.f32.mxu0 0.0
    %239 = vmatmul.mubr.f32.gmra.mrb[0].mxu0 %v21
    %v240 = vpop.f32.mrb[0].mxu0
    %v241 = vadd.f32 0.0, %v240
    %v242 = vpop.f32.mrb[0].mxu0
    %243 = vmatprep.mubr.f32.mxu0 0.0
    %244 = vmatmul.mubr.f32.gmra.mrb[0].mxu0 %v22
    %v245 = vpop.f32.mrb[0].mxu0
    %v246 = vadd.f32 0.0, %v245
    %v247 = vpop.f32.mrb[0].mxu0
    %248 = vmatprep.mubr.f32.mxu0 0.0
    %249 = vmatmul.mubr.f32.gmra.mrb[0].mxu0 %v23
    %v250 = vpop.f32.mrb[0].mxu0
    %v251 = vadd.f32 0.0, %v250
    %v252 = vpop.f32.mrb[0].mxu0
    %253 = vmatprep.mubr.f32.mxu0 0.0
    %254 = vmatmul.mubr.f32.gmra.mrb[0].mxu0 %v24
    %v255 = vpop.f32.mrb[0].mxu0
    %v256 = vadd.f32 0.0, %v255
    %v257 = vpop.f32.mrb[0].mxu0
    %258 = vdwg.mxu0
    %259 = vmatprep.subr.mxu0 0.0
    %260 = vmatpush1.msra.mxu0 %v57
    %261 = vmatprep.subr.mxu0 0.0
    %262 = vmatpush1.msra.mxu0 %v58
    %263 = vmatprep.subr.mxu0 0.0
    %264 = vmatpush1.msra.mxu0 %v59
    %265 = vmatprep.subr.mxu0 0.0
    %266 = vmatpush1.msra.mxu0 %v60
    %267 = vmatprep.subr.mxu0 0.0
    %268 = vmatpush1.msra.mxu0 %v61
    %269 = vmatprep.subr.mxu0 0.0
    %270 = vmatpush1.msra.mxu0 %v62
    %271 = vmatprep.subr.mxu0 0.0
    %272 = vmatpush1.msra.mxu0 %v63
    %273 = vmatprep.subr.mxu0 0.0
    %274 = vmatpush1.msra.mxu0 %v64
    %275 = vmatprep.subr.mxu0 0.0
    %276 = vmatpush1.msra.mxu0 %v65
    %277 = vmatprep.subr.mxu0 0.0
    %278 = vmatpush1.msra.mxu0 %v66
    %279 = vmatprep.subr.mxu0 0.0
    %280 = vmatpush1.msra.mxu0 %v67
    %281 = vmatprep.subr.mxu0 0.0
    %282 = vmatpush1.msra.mxu0 %v68
    %283 = vmatprep.subr.mxu0 0.0
    %284 = vmatpush1.msra.mxu0 %v69
    %285 = vmatprep.subr.mxu0 0.0
    %286 = vmatpush1.msra.mxu0 %v70
    %287 = vmatprep.subr.mxu0 0.0
    %288 = vmatpush1.msra.mxu0 %v71
    %289 = vmatprep.subr.mxu0 0.0
    %290 = vmatpush1.msra.mxu0 %v72
    %291 = vmatprep.subr.mxu0 0.0
    %292 = vmatpush1.msra.mxu0 0.0
    %293 = vmatprep.subr.mxu0 0.0
    %294 = vmatpush1.msra.mxu0 0.0
    %295 = vmatprep.subr.mxu0 0.0
    %296 = vmatpush1.msra.mxu0 0.0
    %297 = vmatprep.subr.mxu0 0.0
    %298 = vmatpush1.msra.mxu0 0.0
    %299 = vmatprep.subr.mxu0 0.0
    %300 = vmatpush1.msra.mxu0 0.0
    %301 = vmatprep.subr.mxu0 0.0
    %302 = vmatpush1.msra.mxu0 0.0
    %303 = vmatprep.subr.mxu0 0.0
    %304 = vmatpush1.msra.mxu0 0.0
    %305 = vmatprep.subr.mxu0 0.0
    %306 = vmatpush1.msra.mxu0 0.0
    %307 = vmatprep.subr.mxu0 0.0
    %308 = vmatpush1.msra.mxu0 0.0
    %309 = vmatprep.subr.mxu0 0.0
    %310 = vmatpush1.msra.mxu0 0.0
    %311 = vmatprep.subr.mxu0 0.0
    %312 = vmatpush1.msra.mxu0 0.0
    %313 = vmatprep.subr.mxu0 0.0
    %314 = vmatpush1.msra.mxu0 0.0
    %315 = vmatprep.subr.mxu0 0.0
    %316 = vmatpush1.msra.mxu0 0.0
    %317 = vmatprep.subr.mxu0 0.0
    %318 = vmatpush1.msra.mxu0 0.0
    %319 = vmatprep.subr.mxu0 0.0
    %320 = vmatpush1.msra.mxu0 0.0
    %321 = vmatprep.subr.mxu0 0.0
    %322 = vmatpush1.msra.mxu0 0.0
    %323 = vmatprep.mubr.f32.mxu0 0.0
    %324 = vmatmul.mubr.f32.gmra.mrb[0].mxu0 %v21
    %v325 = vpop.f32.mrb[0].mxu0
    %v326 = vadd.f32 0.0, %v325
    %v327 = vpop.f32.mrb[0].mxu0
    %328 = vmatprep.mubr.f32.mxu0 0.0
    %329 = vmatmul.mubr.f32.gmra.mrb[0].mxu0 %v22
    %v330 = vpop.f32.mrb[0].mxu0
    %v331 = vadd.f32 0.0, %v330
    %v332 = vpop.f32.mrb[0].mxu0
    %333 = vmatprep.mubr.f32.mxu0 0.0
    %334 = vmatmul.mubr.f32.gmra.mrb[0].mxu0 %v23
    %v335 = vpop.f32.mrb[0].mxu0
    %v336 = vadd.f32 0.0, %v335
    %v337 = vpop.f32.mrb[0].mxu0
    %338 = vmatprep.mubr.f32.mxu0 0.0
    %339 = vmatmul.mubr.f32.gmra.mrb[0].mxu0 %v24
    %v340 = vpop.f32.mrb[0].mxu0
    %v341 = vadd.f32 0.0, %v340
    %v342 = vpop.f32.mrb[0].mxu0
    %343 = vdwg.mxu0
    %344 = vmatprep.subr.mxu0 0.0
    %345 = vmatpush1.msra.mxu0 %v73
    %346 = vmatprep.subr.mxu0 0.0
    %347 = vmatpush1.msra.mxu0 %v74
    %348 = vmatprep.subr.mxu0 0.0
    %349 = vmatpush1.msra.mxu0 %v75
    %350 = vmatprep.subr.mxu0 0.0
    %351 = vmatpush1.msra.mxu0 %v76
    %352 = vmatprep.subr.mxu0 0.0
    %353 = vmatpush1.msra.mxu0 %v77
    %354 = vmatprep.subr.mxu0 0.0
    %355 = vmatpush1.msra.mxu0 %v78
    %356 = vmatprep.subr.mxu0 0.0
    %357 = vmatpush1.msra.mxu0 %v79
    %358 = vmatprep.subr.mxu0 0.0
    %359 = vmatpush1.msra.mxu0 %v80
    %360 = vmatprep.subr.mxu0 0.0
    %361 = vmatpush1.msra.mxu0 %v81
    %362 = vmatprep.subr.mxu0 0.0
    %363 = vmatpush1.msra.mxu0 %v82
    %364 = vmatprep.subr.mxu0 0.0
    %365 = vmatpush1.msra.mxu0 %v83
    %366 = vmatprep.subr.mxu0 0.0
    %367 = vmatpush1.msra.mxu0 %v84
    %368 = vmatprep.subr.mxu0 0.0
    %369 = vmatpush1.msra.mxu0 %v85
    %370 = vmatprep.subr.mxu0 0.0
    %371 = vmatpush1.msra.mxu0 %v86
    %372 = vmatprep.subr.mxu0 0.0
    %373 = vmatpush1.msra.mxu0 %v87
    %374 = vmatprep.subr.mxu0 0.0
    %375 = vmatpush1.msra.mxu0 %v88
    %376 = vmatprep.subr.mxu0 0.0
    %377 = vmatpush1.msra.mxu0 0.0
    %378 = vmatprep.subr.mxu0 0.0
    %379 = vmatpush1.msra.mxu0 0.0
    %380 = vmatprep.subr.mxu0 0.0
    %381 = vmatpush1.msra.mxu0 0.0
    %382 = vmatprep.subr.mxu0 0.0
    %383 = vmatpush1.msra.mxu0 0.0
    %384 = vmatprep.subr.mxu0 0.0
    %385 = vmatpush1.msra.mxu0 0.0
    %386 = vmatprep.subr.mxu0 0.0
    %387 = vmatpush1.msra.mxu0 0.0
    %388 = vmatprep.subr.mxu0 0.0
    %389 = vmatpush1.msra.mxu0 0.0
    %390 = vmatprep.subr.mxu0 0.0
    %391 = vmatpush1.msra.mxu0 0.0
    %392 = vmatprep.subr.mxu0 0.0
    %393 = vmatpush1.msra.mxu0 0.0
    %394 = vmatprep.subr.mxu0 0.0
    %395 = vmatpush1.msra.mxu0 0.0
    %396 = vmatprep.subr.mxu0 0.0
    %397 = vmatpush1.msra.mxu0 0.0
    %398 = vmatprep.subr.mxu0 0.0
    %399 = vmatpush1.msra.mxu0 0.0
    %400 = vmatprep.subr.mxu0 0.0
    %401 = vmatpush1.msra.mxu0 0.0
    %402 = vmatprep.subr.mxu0 0.0
    %403 = vmatpush1.msra.mxu0 0.0
    %404 = vmatprep.subr.mxu0 0.0
    %405 = vmatpush1.msra.mxu0 0.0
    %406 = vmatprep.subr.mxu0 0.0
    %407 = vmatpush1.msra.mxu0 0.0
    %408 = vmatprep.mubr.f32.mxu0 0.0
    %409 = vmatmul.mubr.f32.gmra.mrb[0].mxu0 %v21
    %v410 = vpop.f32.mrb[0].mxu0
    %v411 = vadd.f32 0.0, %v410
    %v412 = vpop.f32.mrb[0].mxu0
    %413 = vmatprep.mubr.f32.mxu0 0.0
    %414 = vmatmul.mubr.f32.gmra.mrb[0].mxu0 %v22
    %v415 = vpop.f32.mrb[0].mxu0
    %v416 = vadd.f32 0.0, %v415
    %v417 = vpop.f32.mrb[0].mxu0
    %418 = vmatprep.mubr.f32.mxu0 0.0
    %419 = vmatmul.mubr.f32.gmra.mrb[0].mxu0 %v23
    %v420 = vpop.f32.mrb[0].mxu0
    %v421 = vadd.f32 0.0, %v420
    %v422 = vpop.f32.mrb[0].mxu0
    %423 = vmatprep.mubr.f32.mxu0 0.0
    %424 = vmatmul.mubr.f32.gmra.mrb[0].mxu0 %v24
    %v425 = vpop.f32.mrb[0].mxu0
    %v426 = vadd.f32 0.0, %v425
    %v427 = vpop.f32.mrb[0].mxu0
    %428 = vdwg.mxu0
    %433 = vrot.lane.b32.xlu0 %v156, 96
    %v434 = vpop.permute.xlu0 %433
    %435 = vrot.lane.b32.xlu0 %v161, 96
    %v436 = vpop.permute.xlu0 %435
    %437 = vrot.lane.b32.xlu0 %v166, 96
    %v438 = vpop.permute.xlu0 %437
    %439 = vrot.lane.b32.xlu0 %v171, 96
    %v440 = vpop.permute.xlu0 %439
    %vm441 = vcmask 261120
    %v442 = vsel %vm441, %v156, 0
    %v444 = vsel %vm441, %v161, 0
    %v446 = vsel %vm441, %v166, 0
    %v448 = vsel %vm441, %v171, 0
    %v450 = vsel %vm441, %v434, 0
    %v452 = vsel %vm441, %v436, 0
    %v454 = vsel %vm441, %v438, 0
    %v456 = vsel %vm441, %v440, 0
    %458 = vmatprep.subr.mxu0 0.0
    %459 = vmatpush1.xpose.msra.mxu0 %v450
    %460 = vmatprep.subr.mxu0 0.0
    %461 = vmatpush1.xpose.msra.mxu0 %v452
    %462 = vmatprep.subr.mxu0 0.0
    %463 = vmatpush1.xpose.msra.mxu0 %v454
    %464 = vmatprep.subr.mxu0 0.0
    %465 = vmatpush1.xpose.msra.mxu0 %v456
    %466 = vmatprep.subr.mxu0 0.0
    %467 = vmatpush1.xpose.msra.mxu0 0.0
    %468 = vmatprep.subr.mxu0 0.0
    %469 = vmatpush1.xpose.msra.mxu0 0.0
    %470 = vmatprep.subr.mxu0 0.0
    %471 = vmatpush1.xpose.msra.mxu0 0.0
    %472 = vmatprep.subr.mxu0 0.0
    %473 = vmatpush1.xpose.msra.mxu0 0.0
    %474 = vmatprep.subr.mxu0 0.0
    %475 = vmatpush1.xpose.msra.mxu0 0.0
    %476 = vmatprep.subr.mxu0 0.0
    %477 = vmatpush1.xpose.msra.mxu0 0.0
    %478 = vmatprep.subr.mxu0 0.0
    %479 = vmatpush1.xpose.msra.mxu0 0.0
    %480 = vmatprep.subr.mxu0 0.0
    %481 = vmatpush1.xpose.msra.mxu0 0.0
    %482 = vmatprep.subr.mxu0 0.0
    %483 = vmatpush1.xpose.msra.mxu0 0.0
    %484 = vmatprep.subr.mxu0 0.0
    %485 = vmatpush1.xpose.msra.mxu0 0.0
    %486 = vmatprep.subr.mxu0 0.0
    %487 = vmatpush1.xpose.msra.mxu0 0.0
    %488 = vmatprep.subr.mxu0 0.0
    %489 = vmatpush1.xpose.msra.mxu0 0.0
    %490 = vmatprep.subr.mxu0 0.0
    %491 = vmatpush1.xpose.msra.mxu0 0.0
    %492 = vmatprep.subr.mxu0 0.0
    %493 = vmatpush1.xpose.msra.mxu0 0.0
    %494 = vmatprep.subr.mxu0 0.0
    %495 = vmatpush1.xpose.msra.mxu0 0.0
    %496 = vmatprep.subr.mxu0 0.0
    %497 = vmatpush1.xpose.msra.mxu0 0.0
    %498 = vmatprep.subr.mxu0 0.0
    %499 = vmatpush1.xpose.msra.mxu0 0.0
    %500 = vmatprep.subr.mxu0 0.0
    %501 = vmatpush1.xpose.msra.mxu0 0.0
    %502 = vmatprep.subr.mxu0 0.0
    %503 = vmatpush1.xpose.msra.mxu0 0.0
    %504 = vmatprep.subr.mxu0 0.0
    %505 = vmatpush1.xpose.msra.mxu0 0.0
    %506 = vmatprep.subr.mxu0 0.0
    %507 = vmatpush1.xpose.msra.mxu0 0.0
    %508 = vmatprep.subr.mxu0 0.0
    %509 = vmatpush1.xpose.msra.mxu0 0.0
    %510 = vmatprep.subr.mxu0 0.0
    %511 = vmatpush1.xpose.msra.mxu0 0.0
    %512 = vmatprep.subr.mxu0 0.0
    %513 = vmatpush1.xpose.msra.mxu0 0.0
    %514 = vmatprep.subr.mxu0 0.0
    %515 = vmatpush1.xpose.msra.mxu0 0.0
    %516 = vmatprep.subr.mxu0 0.0
    %517 = vmatpush1.xpose.msra.mxu0 0.0
    %518 = vmatprep.subr.mxu0 0.0
    %519 = vmatpush1.xpose.msra.mxu0 0.0
    %520 = vmatprep.subr.mxu0 0.0
    %521 = vmatpush1.xpose.msra.mxu0 0.0
    %522 = vmatprep.mubr.f32.mxu0 0.0
    %523 = vmatmul.mubr.f32.gmra.mrb[0].mxu0 %v442
    %v524 = vpop.f32.mrb[0].mxu0
    %v525 = vadd.f32 0.0, %v524
    %v526 = vpop.f32.mrb[0].mxu0
    %527 = vmatprep.mubr.f32.mxu0 0.0
    %528 = vmatmul.mubr.f32.gmra.mrb[0].mxu0 %v444
    %v529 = vpop.f32.mrb[0].mxu0
    %v530 = vadd.f32 0.0, %v529
    %v531 = vpop.f32.mrb[0].mxu0
    %532 = vmatprep.mubr.f32.mxu0 0.0
    %533 = vmatmul.mubr.f32.gmra.mrb[0].mxu0 %v446
    %v534 = vpop.f32.mrb[0].mxu0
    %v535 = vadd.f32 0.0, %v534
    %v536 = vpop.f32.mrb[0].mxu0
    %537 = vmatprep.mubr.f32.mxu0 0.0
    %538 = vmatmul.mubr.f32.gmra.mrb[0].mxu0 %v448
    %v539 = vpop.f32.mrb[0].mxu0
    %v540 = vadd.f32 0.0, %v539
    %v541 = vpop.f32.mrb[0].mxu0
    %542 = vdwg.mxu0
    %547 = vrot.lane.b32.xlu0 %v241, 96
    %v548 = vpop.permute.xlu0 %547
    %549 = vrot.lane.b32.xlu0 %v246, 96
    %v550 = vpop.permute.xlu0 %549
    %551 = vrot.lane.b32.xlu0 %v251, 96
    %v552 = vpop.permute.xlu0 %551
    %553 = vrot.lane.b32.xlu0 %v256, 96
    %v554 = vpop.permute.xlu0 %553
    %v555 = vsel %vm441, %v241, 0
    %v557 = vsel %vm441, %v246, 0
    %v559 = vsel %vm441, %v251, 0
    %v561 = vsel %vm441, %v256, 0
    %v563 = vsel %vm441, %v548, 0
    %v565 = vsel %vm441, %v550, 0
    %v567 = vsel %vm441, %v552, 0
    %v569 = vsel %vm441, %v554, 0
    %571 = vmatprep.subr.mxu0 0.0
    %572 = vmatpush1.xpose.msra.mxu0 %v563
    %573 = vmatprep.subr.mxu0 0.0
    %574 = vmatpush1.xpose.msra.mxu0 %v565
    %575 = vmatprep.subr.mxu0 0.0
    %576 = vmatpush1.xpose.msra.mxu0 %v567
    %577 = vmatprep.subr.mxu0 0.0
    %578 = vmatpush1.xpose.msra.mxu0 %v569
    %579 = vmatprep.subr.mxu0 0.0
    %580 = vmatpush1.xpose.msra.mxu0 0.0
    %581 = vmatprep.subr.mxu0 0.0
    %582 = vmatpush1.xpose.msra.mxu0 0.0
    %583 = vmatprep.subr.mxu0 0.0
    %584 = vmatpush1.xpose.msra.mxu0 0.0
    %585 = vmatprep.subr.mxu0 0.0
    %586 = vmatpush1.xpose.msra.mxu0 0.0
    %587 = vmatprep.subr.mxu0 0.0
    %588 = vmatpush1.xpose.msra.mxu0 0.0
    %589 = vmatprep.subr.mxu0 0.0
    %590 = vmatpush1.xpose.msra.mxu0 0.0
    %591 = vmatprep.subr.mxu0 0.0
    %592 = vmatpush1.xpose.msra.mxu0 0.0
    %593 = vmatprep.subr.mxu0 0.0
    %594 = vmatpush1.xpose.msra.mxu0 0.0
    %595 = vmatprep.subr.mxu0 0.0
    %596 = vmatpush1.xpose.msra.mxu0 0.0
    %597 = vmatprep.subr.mxu0 0.0
    %598 = vmatpush1.xpose.msra.mxu0 0.0
    %599 = vmatprep.subr.mxu0 0.0
    %600 = vmatpush1.xpose.msra.mxu0 0.0
    %601 = vmatprep.subr.mxu0 0.0
    %602 = vmatpush1.xpose.msra.mxu0 0.0
    %603 = vmatprep.subr.mxu0 0.0
    %604 = vmatpush1.xpose.msra.mxu0 0.0
    %605 = vmatprep.subr.mxu0 0.0
    %606 = vmatpush1.xpose.msra.mxu0 0.0
    %607 = vmatprep.subr.mxu0 0.0
    %608 = vmatpush1.xpose.msra.mxu0 0.0
    %609 = vmatprep.subr.mxu0 0.0
    %610 = vmatpush1.xpose.msra.mxu0 0.0
    %611 = vmatprep.subr.mxu0 0.0
    %612 = vmatpush1.xpose.msra.mxu0 0.0
    %613 = vmatprep.subr.mxu0 0.0
    %614 = vmatpush1.xpose.msra.mxu0 0.0
    %615 = vmatprep.subr.mxu0 0.0
    %616 = vmatpush1.xpose.msra.mxu0 0.0
    %617 = vmatprep.subr.mxu0 0.0
    %618 = vmatpush1.xpose.msra.mxu0 0.0
    %619 = vmatprep.subr.mxu0 0.0
    %620 = vmatpush1.xpose.msra.mxu0 0.0
    %621 = vmatprep.subr.mxu0 0.0
    %622 = vmatpush1.xpose.msra.mxu0 0.0
    %623 = vmatprep.subr.mxu0 0.0
    %624 = vmatpush1.xpose.msra.mxu0 0.0
    %625 = vmatprep.subr.mxu0 0.0
    %626 = vmatpush1.xpose.msra.mxu0 0.0
    %627 = vmatprep.subr.mxu0 0.0
    %628 = vmatpush1.xpose.msra.mxu0 0.0
    %629 = vmatprep.subr.mxu0 0.0
    %630 = vmatpush1.xpose.msra.mxu0 0.0
    %631 = vmatprep.subr.mxu0 0.0
    %632 = vmatpush1.xpose.msra.mxu0 0.0
    %633 = vmatprep.subr.mxu0 0.0
    %634 = vmatpush1.xpose.msra.mxu0 0.0
    %635 = vmatprep.mubr.f32.mxu0 0.0
    %636 = vmatmul.mubr.f32.gmra.mrb[0].mxu0 %v555
    %v637 = vpop.f32.mrb[0].mxu0
    %v638 = vadd.f32 0.0, %v637
    %v639 = vpop.f32.mrb[0].mxu0
    %640 = vmatprep.mubr.f32.mxu0 0.0
    %641 = vmatmul.mubr.f32.gmra.mrb[0].mxu0 %v557
    %v642 = vpop.f32.mrb[0].mxu0
    %v643 = vadd.f32 0.0, %v642
    %v644 = vpop.f32.mrb[0].mxu0
    %645 = vmatprep.mubr.f32.mxu0 0.0
    %646 = vmatmul.mubr.f32.gmra.mrb[0].mxu0 %v559
    %v647 = vpop.f32.mrb[0].mxu0
    %v648 = vadd.f32 0.0, %v647
    %v649 = vpop.f32.mrb[0].mxu0
    %650 = vmatprep.mubr.f32.mxu0 0.0
    %651 = vmatmul.mubr.f32.gmra.mrb[0].mxu0 %v561
    %v652 = vpop.f32.mrb[0].mxu0
    %v653 = vadd.f32 0.0, %v652
    %v654 = vpop.f32.mrb[0].mxu0
    %655 = vdwg.mxu0
    %660 = vrot.lane.b32.xlu0 %v326, 96
    %v661 = vpop.permute.xlu0 %660
    %662 = vrot.lane.b32.xlu0 %v331, 96
    %v663 = vpop.permute.xlu0 %662
    %664 = vrot.lane.b32.xlu0 %v336, 96
    %v665 = vpop.permute.xlu0 %664
    %666 = vrot.lane.b32.xlu0 %v341, 96
    %v667 = vpop.permute.xlu0 %666
    %v668 = vsel %vm441, %v326, 0
    %v670 = vsel %vm441, %v331, 0
    %v672 = vsel %vm441, %v336, 0
    %v674 = vsel %vm441, %v341, 0
    %v676 = vsel %vm441, %v661, 0
    %v678 = vsel %vm441, %v663, 0
    %v680 = vsel %vm441, %v665, 0
    %v682 = vsel %vm441, %v667, 0
    %684 = vmatprep.subr.mxu0 0.0
    %685 = vmatpush1.xpose.msra.mxu0 %v676
    %686 = vmatprep.subr.mxu0 0.0
    %687 = vmatpush1.xpose.msra.mxu0 %v678
    %688 = vmatprep.subr.mxu0 0.0
    %689 = vmatpush1.xpose.msra.mxu0 %v680
    %690 = vmatprep.subr.mxu0 0.0
    %691 = vmatpush1.xpose.msra.mxu0 %v682
    %692 = vmatprep.subr.mxu0 0.0
    %693 = vmatpush1.xpose.msra.mxu0 0.0
    %694 = vmatprep.subr.mxu0 0.0
    %695 = vmatpush1.xpose.msra.mxu0 0.0
    %696 = vmatprep.subr.mxu0 0.0
    %697 = vmatpush1.xpose.msra.mxu0 0.0
    %698 = vmatprep.subr.mxu0 0.0
    %699 = vmatpush1.xpose.msra.mxu0 0.0
    %700 = vmatprep.subr.mxu0 0.0
    %701 = vmatpush1.xpose.msra.mxu0 0.0
    %702 = vmatprep.subr.mxu0 0.0
    %703 = vmatpush1.xpose.msra.mxu0 0.0
    %704 = vmatprep.subr.mxu0 0.0
    %705 = vmatpush1.xpose.msra.mxu0 0.0
    %706 = vmatprep.subr.mxu0 0.0
    %707 = vmatpush1.xpose.msra.mxu0 0.0
    %708 = vmatprep.subr.mxu0 0.0
    %709 = vmatpush1.xpose.msra.mxu0 0.0
    %710 = vmatprep.subr.mxu0 0.0
    %711 = vmatpush1.xpose.msra.mxu0 0.0
    %712 = vmatprep.subr.mxu0 0.0
    %713 = vmatpush1.xpose.msra.mxu0 0.0
    %714 = vmatprep.subr.mxu0 0.0
    %715 = vmatpush1.xpose.msra.mxu0 0.0
    %716 = vmatprep.subr.mxu0 0.0
    %717 = vmatpush1.xpose.msra.mxu0 0.0
    %718 = vmatprep.subr.mxu0 0.0
    %719 = vmatpush1.xpose.msra.mxu0 0.0
    %720 = vmatprep.subr.mxu0 0.0
    %721 = vmatpush1.xpose.msra.mxu0 0.0
    %722 = vmatprep.subr.mxu0 0.0
    %723 = vmatpush1.xpose.msra.mxu0 0.0
    %724 = vmatprep.subr.mxu0 0.0
    %725 = vmatpush1.xpose.msra.mxu0 0.0
    %726 = vmatprep.subr.mxu0 0.0
    %727 = vmatpush1.xpose.msra.mxu0 0.0
    %728 = vmatprep.subr.mxu0 0.0
    %729 = vmatpush1.xpose.msra.mxu0 0.0
    %730 = vmatprep.subr.mxu0 0.0
    %731 = vmatpush1.xpose.msra.mxu0 0.0
    %732 = vmatprep.subr.mxu0 0.0
    %733 = vmatpush1.xpose.msra.mxu0 0.0
    %734 = vmatprep.subr.mxu0 0.0
    %735 = vmatpush1.xpose.msra.mxu0 0.0
    %736 = vmatprep.subr.mxu0 0.0
    %737 = vmatpush1.xpose.msra.mxu0 0.0
    %738 = vmatprep.subr.mxu0 0.0
    %739 = vmatpush1.xpose.msra.mxu0 0.0
    %740 = vmatprep.subr.mxu0 0.0
    %741 = vmatpush1.xpose.msra.mxu0 0.0
    %742 = vmatprep.subr.mxu0 0.0
    %743 = vmatpush1.xpose.msra.mxu0 0.0
    %744 = vmatprep.subr.mxu0 0.0
    %745 = vmatpush1.xpose.msra.mxu0 0.0
    %746 = vmatprep.subr.mxu0 0.0
    %747 = vmatpush1.xpose.msra.mxu0 0.0
    %748 = vmatprep.mubr.f32.mxu0 0.0
    %749 = vmatmul.mubr.f32.gmra.mrb[0].mxu0 %v668
    %v750 = vpop.f32.mrb[0].mxu0
    %v751 = vadd.f32 0.0, %v750
    %v752 = vpop.f32.mrb[0].mxu0
    %753 = vmatprep.mubr.f32.mxu0 0.0
    %754 = vmatmul.mubr.f32.gmra.mrb[0].mxu0 %v670
    %v755 = vpop.f32.mrb[0].mxu0
    %v756 = vadd.f32 0.0, %v755
    %v757 = vpop.f32.mrb[0].mxu0
    %758 = vmatprep.mubr.f32.mxu0 0.0
    %759 = vmatmul.mubr.f32.gmra.mrb[0].mxu0 %v672
    %v760 = vpop.f32.mrb[0].mxu0
    %v761 = vadd.f32 0.0, %v760
    %v762 = vpop.f32.mrb[0].mxu0
    %763 = vmatprep.mubr.f32.mxu0 0.0
    %764 = vmatmul.mubr.f32.gmra.mrb[0].mxu0 %v674
    %v765 = vpop.f32.mrb[0].mxu0
    %v766 = vadd.f32 0.0, %v765
    %v767 = vpop.f32.mrb[0].mxu0
    %768 = vdwg.mxu0
    %773 = vrot.lane.b32.xlu0 %v411, 96
    %v774 = vpop.permute.xlu0 %773
    %775 = vrot.lane.b32.xlu0 %v416, 96
    %v776 = vpop.permute.xlu0 %775
    %777 = vrot.lane.b32.xlu0 %v421, 96
    %v778 = vpop.permute.xlu0 %777
    %779 = vrot.lane.b32.xlu0 %v426, 96
    %v780 = vpop.permute.xlu0 %779
    %v781 = vsel %vm441, %v411, 0
    %v783 = vsel %vm441, %v416, 0
    %v785 = vsel %vm441, %v421, 0
    %v787 = vsel %vm441, %v426, 0
    %v789 = vsel %vm441, %v774, 0
    %v791 = vsel %vm441, %v776, 0
    %v793 = vsel %vm441, %v778, 0
    %v795 = vsel %vm441, %v780, 0
    %797 = vmatprep.subr.mxu0 0.0
    %798 = vmatpush1.xpose.msra.mxu0 %v789
    %799 = vmatprep.subr.mxu0 0.0
    %800 = vmatpush1.xpose.msra.mxu0 %v791
    %801 = vmatprep.subr.mxu0 0.0
    %802 = vmatpush1.xpose.msra.mxu0 %v793
    %803 = vmatprep.subr.mxu0 0.0
    %804 = vmatpush1.xpose.msra.mxu0 %v795
    %805 = vmatprep.subr.mxu0 0.0
    %806 = vmatpush1.xpose.msra.mxu0 0.0
    %807 = vmatprep.subr.mxu0 0.0
    %808 = vmatpush1.xpose.msra.mxu0 0.0
    %809 = vmatprep.subr.mxu0 0.0
    %810 = vmatpush1.xpose.msra.mxu0 0.0
    %811 = vmatprep.subr.mxu0 0.0
    %812 = vmatpush1.xpose.msra.mxu0 0.0
    %813 = vmatprep.subr.mxu0 0.0
    %814 = vmatpush1.xpose.msra.mxu0 0.0
    %815 = vmatprep.subr.mxu0 0.0
    %816 = vmatpush1.xpose.msra.mxu0 0.0
    %817 = vmatprep.subr.mxu0 0.0
    %818 = vmatpush1.xpose.msra.mxu0 0.0
    %819 = vmatprep.subr.mxu0 0.0
    %820 = vmatpush1.xpose.msra.mxu0 0.0
    %821 = vmatprep.subr.mxu0 0.0
    %822 = vmatpush1.xpose.msra.mxu0 0.0
    %823 = vmatprep.subr.mxu0 0.0
    %824 = vmatpush1.xpose.msra.mxu0 0.0
    %825 = vmatprep.subr.mxu0 0.0
    %826 = vmatpush1.xpose.msra.mxu0 0.0
    %827 = vmatprep.subr.mxu0 0.0
    %828 = vmatpush1.xpose.msra.mxu0 0.0
    %829 = vmatprep.subr.mxu0 0.0
    %830 = vmatpush1.xpose.msra.mxu0 0.0
    %831 = vmatprep.subr.mxu0 0.0
    %832 = vmatpush1.xpose.msra.mxu0 0.0
    %833 = vmatprep.subr.mxu0 0.0
    %834 = vmatpush1.xpose.msra.mxu0 0.0
    %835 = vmatprep.subr.mxu0 0.0
    %836 = vmatpush1.xpose.msra.mxu0 0.0
    %837 = vmatprep.subr.mxu0 0.0
    %838 = vmatpush1.xpose.msra.mxu0 0.0
    %839 = vmatprep.subr.mxu0 0.0
    %840 = vmatpush1.xpose.msra.mxu0 0.0
    %841 = vmatprep.subr.mxu0 0.0
    %842 = vmatpush1.xpose.msra.mxu0 0.0
    %843 = vmatprep.subr.mxu0 0.0
    %844 = vmatpush1.xpose.msra.mxu0 0.0
    %845 = vmatprep.subr.mxu0 0.0
    %846 = vmatpush1.xpose.msra.mxu0 0.0
    %847 = vmatprep.subr.mxu0 0.0
    %848 = vmatpush1.xpose.msra.mxu0 0.0
    %849 = vmatprep.subr.mxu0 0.0
    %850 = vmatpush1.xpose.msra.mxu0 0.0
    %851 = vmatprep.subr.mxu0 0.0
    %852 = vmatpush1.xpose.msra.mxu0 0.0
    %853 = vmatprep.subr.mxu0 0.0
    %854 = vmatpush1.xpose.msra.mxu0 0.0
    %855 = vmatprep.subr.mxu0 0.0
    %856 = vmatpush1.xpose.msra.mxu0 0.0
    %857 = vmatprep.subr.mxu0 0.0
    %858 = vmatpush1.xpose.msra.mxu0 0.0
    %859 = vmatprep.subr.mxu0 0.0
    %860 = vmatpush1.xpose.msra.mxu0 0.0
    %861 = vmatprep.mubr.f32.mxu0 0.0
    %862 = vmatmul.mubr.f32.gmra.mrb[0].mxu0 %v781
    %v863 = vpop.f32.mrb[0].mxu0
    %v864 = vadd.f32 0.0, %v863
    %v865 = vpop.f32.mrb[0].mxu0
    %866 = vmatprep.mubr.f32.mxu0 0.0
    %867 = vmatmul.mubr.f32.gmra.mrb[0].mxu0 %v783
    %v868 = vpop.f32.mrb[0].mxu0
    %v869 = vadd.f32 0.0, %v868
    %v870 = vpop.f32.mrb[0].mxu0
    %871 = vmatprep.mubr.f32.mxu0 0.0
    %872 = vmatmul.mubr.f32.gmra.mrb[0].mxu0 %v785
    %v873 = vpop.f32.mrb[0].mxu0
    %v874 = vadd.f32 0.0, %v873
    %v875 = vpop.f32.mrb[0].mxu0
    %876 = vmatprep.mubr.f32.mxu0 0.0
    %877 = vmatmul.mubr.f32.gmra.mrb[0].mxu0 %v787
    %v878 = vpop.f32.mrb[0].mxu0
    %v879 = vadd.f32 0.0, %v878
    %v880 = vpop.f32.mrb[0].mxu0
    %881 = vdwg.mxu0
    %v882 = vmul.f32 %v525, 0.088388346
    %v883 = vmul.f32 %v530, 0.088388346
    %v884 = vmul.f32 %v535, 0.088388346
    %v885 = vmul.f32 %v540, 0.088388346
    %v886 = vmul.f32 %v638, 0.088388346
    %v887 = vmul.f32 %v643, 0.088388346
    %v888 = vmul.f32 %v648, 0.088388346
    %v889 = vmul.f32 %v653, 0.088388346
    %v890 = vmul.f32 %v751, 0.088388346
    %v891 = vmul.f32 %v756, 0.088388346
    %v892 = vmul.f32 %v761, 0.088388346
    %v893 = vmul.f32 %v766, 0.088388346
    %v894 = vmul.f32 %v864, 0.088388346
    %v895 = vmul.f32 %v869, 0.088388346
    %v896 = vmul.f32 %v874, 0.088388346
    %v897 = vmul.f32 %v879, 0.088388346
    %v898 = vld [vmem:[%s4] sm:$0xff]
    %v899 = vld [vmem:[%s4 + $0x8] sm:$0xff]
    %v900 = vld [vmem:[%s4 + $0x10] sm:$0xff]
    %v901 = vld [vmem:[%s4 + $0x18] sm:$0xff]
    %v902 = vadd.f32 %v882, %v898
    %v903 = vadd.f32 %v883, %v899
    %v904 = vadd.f32 %v884, %v900
    %v905 = vadd.f32 %v885, %v901
    %v906 = vadd.f32 %v886, %v898
    %v907 = vadd.f32 %v887, %v899
    %v908 = vadd.f32 %v888, %v900
    %v909 = vadd.f32 %v889, %v901
    %v910 = vadd.f32 %v890, %v898
    %v911 = vadd.f32 %v891, %v899
    %v912 = vadd.f32 %v892, %v900
    %v913 = vadd.f32 %v893, %v901
    %v914 = vadd.f32 %v894, %v898
    %v915 = vadd.f32 %v895, %v899
    %v916 = vadd.f32 %v896, %v900
    %v917 = vadd.f32 %v897, %v901
    %v918 = vsel %vm441, %v902, -inf
    %919 = vmax.xlane.f32.xlu0 %v918
    %v920 = vpop.xlane.xlu0 %919
    %v921 = vsel %vm441, %v903, -inf
    %922 = vmax.xlane.f32.xlu0 %v921
    %v923 = vpop.xlane.xlu0 %922
    %v924 = vsel %vm441, %v904, -inf
    %925 = vmax.xlane.f32.xlu0 %v924
    %v926 = vpop.xlane.xlu0 %925
    %v927 = vsel %vm441, %v905, -inf
    %928 = vmax.xlane.f32.xlu0 %v927
    %v929 = vpop.xlane.xlu0 %928
    %v930 = vsel %vm441, %v906, -inf
    %931 = vmax.xlane.f32.xlu0 %v930
    %v932 = vpop.xlane.xlu0 %931
    %v933 = vsel %vm441, %v907, -inf
    %934 = vmax.xlane.f32.xlu0 %v933
    %v935 = vpop.xlane.xlu0 %934
    %v936 = vsel %vm441, %v908, -inf
    %937 = vmax.xlane.f32.xlu0 %v936
    %v938 = vpop.xlane.xlu0 %937
    %v939 = vsel %vm441, %v909, -inf
    %940 = vmax.xlane.f32.xlu0 %v939
    %v941 = vpop.xlane.xlu0 %940
    %v942 = vsel %vm441, %v910, -inf
    %943 = vmax.xlane.f32.xlu0 %v942
    %v944 = vpop.xlane.xlu0 %943
    %v945 = vsel %vm441, %v911, -inf
    %946 = vmax.xlane.f32.xlu0 %v945
    %v947 = vpop.xlane.xlu0 %946
    %v948 = vsel %vm441, %v912, -inf
    %949 = vmax.xlane.f32.xlu0 %v948
    %v950 = vpop.xlane.xlu0 %949
    %v951 = vsel %vm441, %v913, -inf
    %952 = vmax.xlane.f32.xlu0 %v951
    %v953 = vpop.xlane.xlu0 %952
    %v954 = vsel %vm441, %v914, -inf
    %955 = vmax.xlane.f32.xlu0 %v954
    %v956 = vpop.xlane.xlu0 %955
    %v957 = vsel %vm441, %v915, -inf
    %958 = vmax.xlane.f32.xlu0 %v957
    %v959 = vpop.xlane.xlu0 %958
    %v960 = vsel %vm441, %v916, -inf
    %961 = vmax.xlane.f32.xlu0 %v960
    %v962 = vpop.xlane.xlu0 %961
    %v963 = vsel %vm441, %v917, -inf
    %964 = vmax.xlane.f32.xlu0 %v963
    %v965 = vpop.xlane.xlu0 %964
    %v966 = vsub.f32 %v902, %v920
    %v967 = vsub.f32 %v903, %v923
    %v968 = vsub.f32 %v904, %v926
    %v969 = vsub.f32 %v905, %v929
    %v970 = vsub.f32 %v906, %v932
    %v971 = vsub.f32 %v907, %v935
    %v972 = vsub.f32 %v908, %v938
    %v973 = vsub.f32 %v909, %v941
    %v974 = vsub.f32 %v910, %v944
    %v975 = vsub.f32 %v911, %v947
    %v976 = vsub.f32 %v912, %v950
    %v977 = vsub.f32 %v913, %v953
    %v978 = vsub.f32 %v914, %v956
    %v979 = vsub.f32 %v915, %v959
    %v980 = vsub.f32 %v916, %v962
    %v981 = vsub.f32 %v917, %v965
    %v982 = vmul.f32 %v966, 1.442695
    %v983 = vpow.pop %v982
    %v984 = vmul.f32 %v967, 1.442695
    %v985 = vpow.pop %v984
    %v986 = vmul.f32 %v968, 1.442695
    %v987 = vpow.pop %v986
    %v988 = vmul.f32 %v969, 1.442695
    %v989 = vpow.pop %v988
    %v990 = vmul.f32 %v970, 1.442695
    %v991 = vpow.pop %v990
    %v992 = vmul.f32 %v971, 1.442695
    %v993 = vpow.pop %v992
    %v994 = vmul.f32 %v972, 1.442695
    %v995 = vpow.pop %v994
    %v996 = vmul.f32 %v973, 1.442695
    %v997 = vpow.pop %v996
    %v998 = vmul.f32 %v974, 1.442695
    %v999 = vpow.pop %v998
    %v1000 = vmul.f32 %v975, 1.442695
    %v1001 = vpow.pop %v1000
    %v1002 = vmul.f32 %v976, 1.442695
    %v1003 = vpow.pop %v1002
    %v1004 = vmul.f32 %v977, 1.442695
    %v1005 = vpow.pop %v1004
    %v1006 = vmul.f32 %v978, 1.442695
    %v1007 = vpow.pop %v1006
    %v1008 = vmul.f32 %v979, 1.442695
    %v1009 = vpow.pop %v1008
    %v1010 = vmul.f32 %v980, 1.442695
    %v1011 = vpow.pop %v1010
    %v1012 = vmul.f32 %v981, 1.442695
    %v1013 = vpow.pop %v1012
    %v1014 = vsel %vm441, %v983, 0.0
    %1015 = vadd.xlane.f32.xlu0 %v1014
    %v1016 = vpop.xlane.xlu0 %1015
    %v1017 = vsel %vm441, %v985, 0.0
    %1018 = vadd.xlane.f32.xlu0 %v1017
    %v1019 = vpop.xlane.xlu0 %1018
    %v1020 = vsel %vm441, %v987, 0.0
    %1021 = vadd.xlane.f32.xlu0 %v1020
    %v1022 = vpop.xlane.xlu0 %1021
    %v1023 = vsel %vm441, %v989, 0.0
    %1024 = vadd.xlane.f32.xlu0 %v1023
    %v1025 = vpop.xlane.xlu0 %1024
    %v1026 = vsel %vm441, %v991, 0.0
    %1027 = vadd.xlane.f32.xlu0 %v1026
    %v1028 = vpop.xlane.xlu0 %1027
    %v1029 = vsel %vm441, %v993, 0.0
    %1030 = vadd.xlane.f32.xlu0 %v1029
    %v1031 = vpop.xlane.xlu0 %1030
    %v1032 = vsel %vm441, %v995, 0.0
    %1033 = vadd.xlane.f32.xlu0 %v1032
    %v1034 = vpop.xlane.xlu0 %1033
    %v1035 = vsel %vm441, %v997, 0.0
    %1036 = vadd.xlane.f32.xlu0 %v1035
    %v1037 = vpop.xlane.xlu0 %1036
    %v1038 = vsel %vm441, %v999, 0.0
    %1039 = vadd.xlane.f32.xlu0 %v1038
    %v1040 = vpop.xlane.xlu0 %1039
    %v1041 = vsel %vm441, %v1001, 0.0
    %1042 = vadd.xlane.f32.xlu0 %v1041
    %v1043 = vpop.xlane.xlu0 %1042
    %v1044 = vsel %vm441, %v1003, 0.0
    %1045 = vadd.xlane.f32.xlu0 %v1044
    %v1046 = vpop.xlane.xlu0 %1045
    %v1047 = vsel %vm441, %v1005, 0.0
    %1048 = vadd.xlane.f32.xlu0 %v1047
    %v1049 = vpop.xlane.xlu0 %1048
    %v1050 = vsel %vm441, %v1007, 0.0
    %1051 = vadd.xlane.f32.xlu0 %v1050
    %v1052 = vpop.xlane.xlu0 %1051
    %v1053 = vsel %vm441, %v1009, 0.0
    %1054 = vadd.xlane.f32.xlu0 %v1053
    %v1055 = vpop.xlane.xlu0 %1054
    %v1056 = vsel %vm441, %v1011, 0.0
    %1057 = vadd.xlane.f32.xlu0 %v1056
    %v1058 = vpop.xlane.xlu0 %1057
    %v1059 = vsel %vm441, %v1013, 0.0
    %1060 = vadd.xlane.f32.xlu0 %v1059
    %v1061 = vpop.xlane.xlu0 %1060
    %v1062 = vrcp.pop %v1016
    %v1063 = vrcp.pop %v1019
    %v1064 = vrcp.pop %v1022
    %v1065 = vrcp.pop %v1025
    %v1066 = vrcp.pop %v1028
    %v1067 = vrcp.pop %v1031
    %v1068 = vrcp.pop %v1034
    %v1069 = vrcp.pop %v1037
    %v1070 = vrcp.pop %v1040
    %v1071 = vrcp.pop %v1043
    %v1072 = vrcp.pop %v1046
    %v1073 = vrcp.pop %v1049
    %v1074 = vrcp.pop %v1052
    %v1075 = vrcp.pop %v1055
    %v1076 = vrcp.pop %v1058
    %v1077 = vrcp.pop %v1061
    %v1078 = vmul.f32 %v983, %v1062
    %v1079 = vmul.f32 %v985, %v1063
    %v1080 = vmul.f32 %v987, %v1064
    %v1081 = vmul.f32 %v989, %v1065
    %v1082 = vmul.f32 %v991, %v1066
    %v1083 = vmul.f32 %v993, %v1067
    %v1084 = vmul.f32 %v995, %v1068
    %v1085 = vmul.f32 %v997, %v1069
    %v1086 = vmul.f32 %v999, %v1070
    %v1087 = vmul.f32 %v1001, %v1071
    %v1088 = vmul.f32 %v1003, %v1072
    %v1089 = vmul.f32 %v1005, %v1073
    %v1090 = vmul.f32 %v1007, %v1074
    %v1091 = vmul.f32 %v1009, %v1075
    %v1092 = vmul.f32 %v1011, %v1076
    %v1093 = vmul.f32 %v1013, %v1077
    %1094 = vrot.lane.b32.xlu0 %v156, 64
    %v1095 = vpop.permute.xlu0 %1094
    %1096 = vrot.lane.b32.xlu0 %v161, 64
    %v1097 = vpop.permute.xlu0 %1096
    %1098 = vrot.lane.b32.xlu0 %v166, 64
    %v1099 = vpop.permute.xlu0 %1098
    %1100 = vrot.lane.b32.xlu0 %v171, 64
    %v1101 = vpop.permute.xlu0 %1100
    %v1107 = vsel %vm441, %v1078, 0
    %v1110 = vsel %vm441, %v1079, 0
    %v1113 = vsel %vm441, %v1080, 0
    %v1116 = vsel %vm441, %v1081, 0
    %1118 = vmatprep.subr.mxu0 0.0
    %1119 = vmatpush1.msra.mxu0 %v1095
    %1120 = vmatprep.subr.mxu0 0.0
    %1121 = vmatpush1.msra.mxu0 %v1097
    %1122 = vmatprep.subr.mxu0 0.0
    %1123 = vmatpush1.msra.mxu0 %v1099
    %1124 = vmatprep.subr.mxu0 0.0
    %1125 = vmatpush1.msra.mxu0 %v1101
    %1126 = vmatprep.subr.mxu0 0.0
    %1127 = vmatpush1.msra.mxu0 0.0
    %1128 = vmatprep.subr.mxu0 0.0
    %1129 = vmatpush1.msra.mxu0 0.0
    %1130 = vmatprep.subr.mxu0 0.0
    %1131 = vmatpush1.msra.mxu0 0.0
    %1132 = vmatprep.subr.mxu0 0.0
    %1133 = vmatpush1.msra.mxu0 0.0
    %1134 = vmatprep.subr.mxu0 0.0
    %1135 = vmatpush1.msra.mxu0 0.0
    %1136 = vmatprep.subr.mxu0 0.0
    %1137 = vmatpush1.msra.mxu0 0.0
    %1138 = vmatprep.subr.mxu0 0.0
    %1139 = vmatpush1.msra.mxu0 0.0
    %1140 = vmatprep.subr.mxu0 0.0
    %1141 = vmatpush1.msra.mxu0 0.0
    %1142 = vmatprep.subr.mxu0 0.0
    %1143 = vmatpush1.msra.mxu0 0.0
    %1144 = vmatprep.subr.mxu0 0.0
    %1145 = vmatpush1.msra.mxu0 0.0
    %1146 = vmatprep.subr.mxu0 0.0
    %1147 = vmatpush1.msra.mxu0 0.0
    %1148 = vmatprep.subr.mxu0 0.0
    %1149 = vmatpush1.msra.mxu0 0.0
    %1150 = vmatprep.subr.mxu0 0.0
    %1151 = vmatpush1.msra.mxu0 0.0
    %1152 = vmatprep.subr.mxu0 0.0
    %1153 = vmatpush1.msra.mxu0 0.0
    %1154 = vmatprep.subr.mxu0 0.0
    %1155 = vmatpush1.msra.mxu0 0.0
    %1156 = vmatprep.subr.mxu0 0.0
    %1157 = vmatpush1.msra.mxu0 0.0
    %1158 = vmatprep.subr.mxu0 0.0
    %1159 = vmatpush1.msra.mxu0 0.0
    %1160 = vmatprep.subr.mxu0 0.0
    %1161 = vmatpush1.msra.mxu0 0.0
    %1162 = vmatprep.subr.mxu0 0.0
    %1163 = vmatpush1.msra.mxu0 0.0
    %1164 = vmatprep.subr.mxu0 0.0
    %1165 = vmatpush1.msra.mxu0 0.0
    %1166 = vmatprep.subr.mxu0 0.0
    %1167 = vmatpush1.msra.mxu0 0.0
    %1168 = vmatprep.subr.mxu0 0.0
    %1169 = vmatpush1.msra.mxu0 0.0
    %1170 = vmatprep.subr.mxu0 0.0
    %1171 = vmatpush1.msra.mxu0 0.0
    %1172 = vmatprep.subr.mxu0 0.0
    %1173 = vmatpush1.msra.mxu0 0.0
    %1174 = vmatprep.subr.mxu0 0.0
    %1175 = vmatpush1.msra.mxu0 0.0
    %1176 = vmatprep.subr.mxu0 0.0
    %1177 = vmatpush1.msra.mxu0 0.0
    %1178 = vmatprep.subr.mxu0 0.0
    %1179 = vmatpush1.msra.mxu0 0.0
    %1180 = vmatprep.subr.mxu0 0.0
    %1181 = vmatpush1.msra.mxu0 0.0
    %1182 = vmatprep.mubr.f32.mxu0 0.0
    %1183 = vmatmul.mubr.f32.gmra.mrb[0].mxu0 %v1107
    %v1184 = vpop.f32.mrb[0].mxu0
    %v1185 = vadd.f32 0.0, %v1184
    %v1186 = vpop.f32.mrb[0].mxu0
    %1187 = vmatprep.mubr.f32.mxu0 0.0
    %1188 = vmatmul.mubr.f32.gmra.mrb[0].mxu0 %v1110
    %v1189 = vpop.f32.mrb[0].mxu0
    %v1190 = vadd.f32 0.0, %v1189
    %v1191 = vpop.f32.mrb[0].mxu0
    %1192 = vmatprep.mubr.f32.mxu0 0.0
    %1193 = vmatmul.mubr.f32.gmra.mrb[0].mxu0 %v1113
    %v1194 = vpop.f32.mrb[0].mxu0
    %v1195 = vadd.f32 0.0, %v1194
    %v1196 = vpop.f32.mrb[0].mxu0
    %1197 = vmatprep.mubr.f32.mxu0 0.0
    %1198 = vmatmul.mubr.f32.gmra.mrb[0].mxu0 %v1116
    %v1199 = vpop.f32.mrb[0].mxu0
    %v1200 = vadd.f32 0.0, %v1199
    %v1201 = vpop.f32.mrb[0].mxu0
    %1202 = vdwg.mxu0
    %1203 = vrot.lane.b32.xlu0 %v241, 64
    %v1204 = vpop.permute.xlu0 %1203
    %1205 = vrot.lane.b32.xlu0 %v246, 64
    %v1206 = vpop.permute.xlu0 %1205
    %1207 = vrot.lane.b32.xlu0 %v251, 64
    %v1208 = vpop.permute.xlu0 %1207
    %1209 = vrot.lane.b32.xlu0 %v256, 64
    %v1210 = vpop.permute.xlu0 %1209
    %v1216 = vsel %vm441, %v1082, 0
    %v1219 = vsel %vm441, %v1083, 0
    %v1222 = vsel %vm441, %v1084, 0
    %v1225 = vsel %vm441, %v1085, 0
    %1227 = vmatprep.subr.mxu0 0.0
    %1228 = vmatpush1.msra.mxu0 %v1204
    %1229 = vmatprep.subr.mxu0 0.0
    %1230 = vmatpush1.msra.mxu0 %v1206
    %1231 = vmatprep.subr.mxu0 0.0
    %1232 = vmatpush1.msra.mxu0 %v1208
    %1233 = vmatprep.subr.mxu0 0.0
    %1234 = vmatpush1.msra.mxu0 %v1210
    %1235 = vmatprep.subr.mxu0 0.0
    %1236 = vmatpush1.msra.mxu0 0.0
    %1237 = vmatprep.subr.mxu0 0.0
    %1238 = vmatpush1.msra.mxu0 0.0
    %1239 = vmatprep.subr.mxu0 0.0
    %1240 = vmatpush1.msra.mxu0 0.0
    %1241 = vmatprep.subr.mxu0 0.0
    %1242 = vmatpush1.msra.mxu0 0.0
    %1243 = vmatprep.subr.mxu0 0.0
    %1244 = vmatpush1.msra.mxu0 0.0
    %1245 = vmatprep.subr.mxu0 0.0
    %1246 = vmatpush1.msra.mxu0 0.0
    %1247 = vmatprep.subr.mxu0 0.0
    %1248 = vmatpush1.msra.mxu0 0.0
    %1249 = vmatprep.subr.mxu0 0.0
    %1250 = vmatpush1.msra.mxu0 0.0
    %1251 = vmatprep.subr.mxu0 0.0
    %1252 = vmatpush1.msra.mxu0 0.0
    %1253 = vmatprep.subr.mxu0 0.0
    %1254 = vmatpush1.msra.mxu0 0.0
    %1255 = vmatprep.subr.mxu0 0.0
    %1256 = vmatpush1.msra.mxu0 0.0
    %1257 = vmatprep.subr.mxu0 0.0
    %1258 = vmatpush1.msra.mxu0 0.0
    %1259 = vmatprep.subr.mxu0 0.0
    %1260 = vmatpush1.msra.mxu0 0.0
    %1261 = vmatprep.subr.mxu0 0.0
    %1262 = vmatpush1.msra.mxu0 0.0
    %1263 = vmatprep.subr.mxu0 0.0
    %1264 = vmatpush1.msra.mxu0 0.0
    %1265 = vmatprep.subr.mxu0 0.0
    %1266 = vmatpush1.msra.mxu0 0.0
    %1267 = vmatprep.subr.mxu0 0.0
    %1268 = vmatpush1.msra.mxu0 0.0
    %1269 = vmatprep.subr.mxu0 0.0
    %1270 = vmatpush1.msra.mxu0 0.0
    %1271 = vmatprep.subr.mxu0 0.0
    %1272 = vmatpush1.msra.mxu0 0.0
    %1273 = vmatprep.subr.mxu0 0.0
    %1274 = vmatpush1.msra.mxu0 0.0
    %1275 = vmatprep.subr.mxu0 0.0
    %1276 = vmatpush1.msra.mxu0 0.0
    %1277 = vmatprep.subr.mxu0 0.0
    %1278 = vmatpush1.msra.mxu0 0.0
    %1279 = vmatprep.subr.mxu0 0.0
    %1280 = vmatpush1.msra.mxu0 0.0
    %1281 = vmatprep.subr.mxu0 0.0
    %1282 = vmatpush1.msra.mxu0 0.0
    %1283 = vmatprep.subr.mxu0 0.0
    %1284 = vmatpush1.msra.mxu0 0.0
    %1285 = vmatprep.subr.mxu0 0.0
    %1286 = vmatpush1.msra.mxu0 0.0
    %1287 = vmatprep.subr.mxu0 0.0
    %1288 = vmatpush1.msra.mxu0 0.0
    %1289 = vmatprep.subr.mxu0 0.0
    %1290 = vmatpush1.msra.mxu0 0.0
    %1291 = vmatprep.mubr.f32.mxu0 0.0
    %1292 = vmatmul.mubr.f32.gmra.mrb[0].mxu0 %v1216
    %v1293 = vpop.f32.mrb[0].mxu0
    %v1294 = vadd.f32 0.0, %v1293
    %v1295 = vpop.f32.mrb[0].mxu0
    %1296 = vmatprep.mubr.f32.mxu0 0.0
    %1297 = vmatmul.mubr.f32.gmra.mrb[0].mxu0 %v1219
    %v1298 = vpop.f32.mrb[0].mxu0
    %v1299 = vadd.f32 0.0, %v1298
    %v1300 = vpop.f32.mrb[0].mxu0
    %1301 = vmatprep.mubr.f32.mxu0 0.0
    %1302 = vmatmul.mubr.f32.gmra.mrb[0].mxu0 %v1222
    %v1303 = vpop.f32.mrb[0].mxu0
    %v1304 = vadd.f32 0.0, %v1303
    %v1305 = vpop.f32.mrb[0].mxu0
    %1306 = vmatprep.mubr.f32.mxu0 0.0
    %1307 = vmatmul.mubr.f32.gmra.mrb[0].mxu0 %v1225
    %v1308 = vpop.f32.mrb[0].mxu0
    %v1309 = vadd.f32 0.0, %v1308
    %v1310 = vpop.f32.mrb[0].mxu0
    %1311 = vdwg.mxu0
    %1312 = vrot.lane.b32.xlu0 %v326, 64
    %v1313 = vpop.permute.xlu0 %1312
    %1314 = vrot.lane.b32.xlu0 %v331, 64
    %v1315 = vpop.permute.xlu0 %1314
    %1316 = vrot.lane.b32.xlu0 %v336, 64
    %v1317 = vpop.permute.xlu0 %1316
    %1318 = vrot.lane.b32.xlu0 %v341, 64
    %v1319 = vpop.permute.xlu0 %1318
    %v1325 = vsel %vm441, %v1086, 0
    %v1328 = vsel %vm441, %v1087, 0
    %v1331 = vsel %vm441, %v1088, 0
    %v1334 = vsel %vm441, %v1089, 0
    %1336 = vmatprep.subr.mxu0 0.0
    %1337 = vmatpush1.msra.mxu0 %v1313
    %1338 = vmatprep.subr.mxu0 0.0
    %1339 = vmatpush1.msra.mxu0 %v1315
    %1340 = vmatprep.subr.mxu0 0.0
    %1341 = vmatpush1.msra.mxu0 %v1317
    %1342 = vmatprep.subr.mxu0 0.0
    %1343 = vmatpush1.msra.mxu0 %v1319
    %1344 = vmatprep.subr.mxu0 0.0
    %1345 = vmatpush1.msra.mxu0 0.0
    %1346 = vmatprep.subr.mxu0 0.0
    %1347 = vmatpush1.msra.mxu0 0.0
    %1348 = vmatprep.subr.mxu0 0.0
    %1349 = vmatpush1.msra.mxu0 0.0
    %1350 = vmatprep.subr.mxu0 0.0
    %1351 = vmatpush1.msra.mxu0 0.0
    %1352 = vmatprep.subr.mxu0 0.0
    %1353 = vmatpush1.msra.mxu0 0.0
    %1354 = vmatprep.subr.mxu0 0.0
    %1355 = vmatpush1.msra.mxu0 0.0
    %1356 = vmatprep.subr.mxu0 0.0
    %1357 = vmatpush1.msra.mxu0 0.0
    %1358 = vmatprep.subr.mxu0 0.0
    %1359 = vmatpush1.msra.mxu0 0.0
    %1360 = vmatprep.subr.mxu0 0.0
    %1361 = vmatpush1.msra.mxu0 0.0
    %1362 = vmatprep.subr.mxu0 0.0
    %1363 = vmatpush1.msra.mxu0 0.0
    %1364 = vmatprep.subr.mxu0 0.0
    %1365 = vmatpush1.msra.mxu0 0.0
    %1366 = vmatprep.subr.mxu0 0.0
    %1367 = vmatpush1.msra.mxu0 0.0
    %1368 = vmatprep.subr.mxu0 0.0
    %1369 = vmatpush1.msra.mxu0 0.0
    %1370 = vmatprep.subr.mxu0 0.0
    %1371 = vmatpush1.msra.mxu0 0.0
    %1372 = vmatprep.subr.mxu0 0.0
    %1373 = vmatpush1.msra.mxu0 0.0
    %1374 = vmatprep.subr.mxu0 0.0
    %1375 = vmatpush1.msra.mxu0 0.0
    %1376 = vmatprep.subr.mxu0 0.0
    %1377 = vmatpush1.msra.mxu0 0.0
    %1378 = vmatprep.subr.mxu0 0.0
    %1379 = vmatpush1.msra.mxu0 0.0
    %1380 = vmatprep.subr.mxu0 0.0
    %1381 = vmatpush1.msra.mxu0 0.0
    %1382 = vmatprep.subr.mxu0 0.0
    %1383 = vmatpush1.msra.mxu0 0.0
    %1384 = vmatprep.subr.mxu0 0.0
    %1385 = vmatpush1.msra.mxu0 0.0
    %1386 = vmatprep.subr.mxu0 0.0
    %1387 = vmatpush1.msra.mxu0 0.0
    %1388 = vmatprep.subr.mxu0 0.0
    %1389 = vmatpush1.msra.mxu0 0.0
    %1390 = vmatprep.subr.mxu0 0.0
    %1391 = vmatpush1.msra.mxu0 0.0
    %1392 = vmatprep.subr.mxu0 0.0
    %1393 = vmatpush1.msra.mxu0 0.0
    %1394 = vmatprep.subr.mxu0 0.0
    %1395 = vmatpush1.msra.mxu0 0.0
    %1396 = vmatprep.subr.mxu0 0.0
    %1397 = vmatpush1.msra.mxu0 0.0
    %1398 = vmatprep.subr.mxu0 0.0
    %1399 = vmatpush1.msra.mxu0 0.0
    %1400 = vmatprep.mubr.f32.mxu0 0.0
    %1401 = vmatmul.mubr.f32.gmra.mrb[0].mxu0 %v1325
    %v1402 = vpop.f32.mrb[0].mxu0
    %v1403 = vadd.f32 0.0, %v1402
    %v1404 = vpop.f32.mrb[0].mxu0
    %1405 = vmatprep.mubr.f32.mxu0 0.0
    %1406 = vmatmul.mubr.f32.gmra.mrb[0].mxu0 %v1328
    %v1407 = vpop.f32.mrb[0].mxu0
    %v1408 = vadd.f32 0.0, %v1407
    %v1409 = vpop.f32.mrb[0].mxu0
    %1410 = vmatprep.mubr.f32.mxu0 0.0
    %1411 = vmatmul.mubr.f32.gmra.mrb[0].mxu0 %v1331
    %v1412 = vpop.f32.mrb[0].mxu0
    %v1413 = vadd.f32 0.0, %v1412
    %v1414 = vpop.f32.mrb[0].mxu0
    %1415 = vmatprep.mubr.f32.mxu0 0.0
    %1416 = vmatmul.mubr.f32.gmra.mrb[0].mxu0 %v1334
    %v1417 = vpop.f32.mrb[0].mxu0
    %v1418 = vadd.f32 0.0, %v1417
    %v1419 = vpop.f32.mrb[0].mxu0
    %1420 = vdwg.mxu0
    %1421 = vrot.lane.b32.xlu0 %v411, 64
    %v1422 = vpop.permute.xlu0 %1421
    %1423 = vrot.lane.b32.xlu0 %v416, 64
    %v1424 = vpop.permute.xlu0 %1423
    %1425 = vrot.lane.b32.xlu0 %v421, 64
    %v1426 = vpop.permute.xlu0 %1425
    %1427 = vrot.lane.b32.xlu0 %v426, 64
    %v1428 = vpop.permute.xlu0 %1427
    %v1434 = vsel %vm441, %v1090, 0
    %v1437 = vsel %vm441, %v1091, 0
    %v1440 = vsel %vm441, %v1092, 0
    %v1443 = vsel %vm441, %v1093, 0
    %1445 = vmatprep.subr.mxu0 0.0
    %1446 = vmatpush1.msra.mxu0 %v1422
    %1447 = vmatprep.subr.mxu0 0.0
    %1448 = vmatpush1.msra.mxu0 %v1424
    %1449 = vmatprep.subr.mxu0 0.0
    %1450 = vmatpush1.msra.mxu0 %v1426
    %1451 = vmatprep.subr.mxu0 0.0
    %1452 = vmatpush1.msra.mxu0 %v1428
    %1453 = vmatprep.subr.mxu0 0.0
    %1454 = vmatpush1.msra.mxu0 0.0
    %1455 = vmatprep.subr.mxu0 0.0
    %1456 = vmatpush1.msra.mxu0 0.0
    %1457 = vmatprep.subr.mxu0 0.0
    %1458 = vmatpush1.msra.mxu0 0.0
    %1459 = vmatprep.subr.mxu0 0.0
    %1460 = vmatpush1.msra.mxu0 0.0
    %1461 = vmatprep.subr.mxu0 0.0
    %1462 = vmatpush1.msra.mxu0 0.0
    %1463 = vmatprep.subr.mxu0 0.0
    %1464 = vmatpush1.msra.mxu0 0.0
    %1465 = vmatprep.subr.mxu0 0.0
    %1466 = vmatpush1.msra.mxu0 0.0
    %1467 = vmatprep.subr.mxu0 0.0
    %1468 = vmatpush1.msra.mxu0 0.0
    %1469 = vmatprep.subr.mxu0 0.0
    %1470 = vmatpush1.msra.mxu0 0.0
    %1471 = vmatprep.subr.mxu0 0.0
    %1472 = vmatpush1.msra.mxu0 0.0
    %1473 = vmatprep.subr.mxu0 0.0
    %1474 = vmatpush1.msra.mxu0 0.0
    %1475 = vmatprep.subr.mxu0 0.0
    %1476 = vmatpush1.msra.mxu0 0.0
    %1477 = vmatprep.subr.mxu0 0.0
    %1478 = vmatpush1.msra.mxu0 0.0
    %1479 = vmatprep.subr.mxu0 0.0
    %1480 = vmatpush1.msra.mxu0 0.0
    %1481 = vmatprep.subr.mxu0 0.0
    %1482 = vmatpush1.msra.mxu0 0.0
    %1483 = vmatprep.subr.mxu0 0.0
    %1484 = vmatpush1.msra.mxu0 0.0
    %1485 = vmatprep.subr.mxu0 0.0
    %1486 = vmatpush1.msra.mxu0 0.0
    %1487 = vmatprep.subr.mxu0 0.0
    %1488 = vmatpush1.msra.mxu0 0.0
    %1489 = vmatprep.subr.mxu0 0.0
    %1490 = vmatpush1.msra.mxu0 0.0
    %1491 = vmatprep.subr.mxu0 0.0
    %1492 = vmatpush1.msra.mxu0 0.0
    %1493 = vmatprep.subr.mxu0 0.0
    %1494 = vmatpush1.msra.mxu0 0.0
    %1495 = vmatprep.subr.mxu0 0.0
    %1496 = vmatpush1.msra.mxu0 0.0
    %1497 = vmatprep.subr.mxu0 0.0
    %1498 = vmatpush1.msra.mxu0 0.0
    %1499 = vmatprep.subr.mxu0 0.0
    %1500 = vmatpush1.msra.mxu0 0.0
    %1501 = vmatprep.subr.mxu0 0.0
    %1502 = vmatpush1.msra.mxu0 0.0
    %1503 = vmatprep.subr.mxu0 0.0
    %1504 = vmatpush1.msra.mxu0 0.0
    %1505 = vmatprep.subr.mxu0 0.0
    %1506 = vmatpush1.msra.mxu0 0.0
    %1507 = vmatprep.subr.mxu0 0.0
    %1508 = vmatpush1.msra.mxu0 0.0
    %1509 = vmatprep.mubr.f32.mxu0 0.0
    %1510 = vmatmul.mubr.f32.gmra.mrb[0].mxu0 %v1434
    %v1511 = vpop.f32.mrb[0].mxu0
    %v1512 = vadd.f32 0.0, %v1511
    %v1513 = vpop.f32.mrb[0].mxu0
    %1514 = vmatprep.mubr.f32.mxu0 0.0
    %1515 = vmatmul.mubr.f32.gmra.mrb[0].mxu0 %v1437
    %v1516 = vpop.f32.mrb[0].mxu0
    %v1517 = vadd.f32 0.0, %v1516
    %v1518 = vpop.f32.mrb[0].mxu0
    %1519 = vmatprep.mubr.f32.mxu0 0.0
    %1520 = vmatmul.mubr.f32.gmra.mrb[0].mxu0 %v1440
    %v1521 = vpop.f32.mrb[0].mxu0
    %v1522 = vadd.f32 0.0, %v1521
    %v1523 = vpop.f32.mrb[0].mxu0
    %1524 = vmatprep.mubr.f32.mxu0 0.0
    %1525 = vmatmul.mubr.f32.gmra.mrb[0].mxu0 %v1443
    %v1526 = vpop.f32.mrb[0].mxu0
    %v1527 = vadd.f32 0.0, %v1526
    %v1528 = vpop.f32.mrb[0].mxu0
    %1529 = vdwg.mxu0
    %v1530 = vld [vmem:[%s2] sm:$0xff]
    %v1531 = vld [vmem:[%s2 + $0x8] sm:$0xff]
    %v1532 = vld [vmem:[%s2 + $0x10] sm:$0xff]
    %v1533 = vld [vmem:[%s2 + $0x18] sm:$0xff]
    %v1534 = vld [vmem:[%s2 + $0x20] sm:$0xff]
    %v1535 = vld [vmem:[%s2 + $0x28] sm:$0xff]
    %v1536 = vld [vmem:[%s2 + $0x30] sm:$0xff]
    %v1537 = vld [vmem:[%s2 + $0x38] sm:$0xff]
    %v1538 = vld [vmem:[%s2 + $0x40] sm:$0xff]
    %v1539 = vld [vmem:[%s2 + $0x48] sm:$0xff]
    %v1540 = vld [vmem:[%s2 + $0x50] sm:$0xff]
    %v1541 = vld [vmem:[%s2 + $0x58] sm:$0xff]
    %v1542 = vld [vmem:[%s2 + $0x60] sm:$0xff]
    %v1543 = vld [vmem:[%s2 + $0x68] sm:$0xff]
    %v1544 = vld [vmem:[%s2 + $0x70] sm:$0xff]
    %v1545 = vld [vmem:[%s2 + $0x78] sm:$0xff]
    %v1547 = vsel %vm441, %v1185, 0
    %v1550 = vsel %vm441, %v1190, 0
    %v1553 = vsel %vm441, %v1195, 0
    %v1556 = vsel %vm441, %v1200, 0
    %1558 = vmatprep.subr.mxu0 0.0
    %1559 = vmatpush1.msra.mxu0 %v1530
    %1560 = vmatprep.subr.mxu0 0.0
    %1561 = vmatpush1.msra.mxu0 %v1531
    %1562 = vmatprep.subr.mxu0 0.0
    %1563 = vmatpush1.msra.mxu0 %v1532
    %1564 = vmatprep.subr.mxu0 0.0
    %1565 = vmatpush1.msra.mxu0 %v1533
    %1566 = vmatprep.subr.mxu0 0.0
    %1567 = vmatpush1.msra.mxu0 0.0
    %1568 = vmatprep.subr.mxu0 0.0
    %1569 = vmatpush1.msra.mxu0 0.0
    %1570 = vmatprep.subr.mxu0 0.0
    %1571 = vmatpush1.msra.mxu0 0.0
    %1572 = vmatprep.subr.mxu0 0.0
    %1573 = vmatpush1.msra.mxu0 0.0
    %1574 = vmatprep.subr.mxu0 0.0
    %1575 = vmatpush1.msra.mxu0 0.0
    %1576 = vmatprep.subr.mxu0 0.0
    %1577 = vmatpush1.msra.mxu0 0.0
    %1578 = vmatprep.subr.mxu0 0.0
    %1579 = vmatpush1.msra.mxu0 0.0
    %1580 = vmatprep.subr.mxu0 0.0
    %1581 = vmatpush1.msra.mxu0 0.0
    %1582 = vmatprep.subr.mxu0 0.0
    %1583 = vmatpush1.msra.mxu0 0.0
    %1584 = vmatprep.subr.mxu0 0.0
    %1585 = vmatpush1.msra.mxu0 0.0
    %1586 = vmatprep.subr.mxu0 0.0
    %1587 = vmatpush1.msra.mxu0 0.0
    %1588 = vmatprep.subr.mxu0 0.0
    %1589 = vmatpush1.msra.mxu0 0.0
    %1590 = vmatprep.subr.mxu0 0.0
    %1591 = vmatpush1.msra.mxu0 0.0
    %1592 = vmatprep.subr.mxu0 0.0
    %1593 = vmatpush1.msra.mxu0 0.0
    %1594 = vmatprep.subr.mxu0 0.0
    %1595 = vmatpush1.msra.mxu0 0.0
    %1596 = vmatprep.subr.mxu0 0.0
    %1597 = vmatpush1.msra.mxu0 0.0
    %1598 = vmatprep.subr.mxu0 0.0
    %1599 = vmatpush1.msra.mxu0 0.0
    %1600 = vmatprep.subr.mxu0 0.0
    %1601 = vmatpush1.msra.mxu0 0.0
    %1602 = vmatprep.subr.mxu0 0.0
    %1603 = vmatpush1.msra.mxu0 0.0
    %1604 = vmatprep.subr.mxu0 0.0
    %1605 = vmatpush1.msra.mxu0 0.0
    %1606 = vmatprep.subr.mxu0 0.0
    %1607 = vmatpush1.msra.mxu0 0.0
    %1608 = vmatprep.subr.mxu0 0.0
    %1609 = vmatpush1.msra.mxu0 0.0
    %1610 = vmatprep.subr.mxu0 0.0
    %1611 = vmatpush1.msra.mxu0 0.0
    %1612 = vmatprep.subr.mxu0 0.0
    %1613 = vmatpush1.msra.mxu0 0.0
    %1614 = vmatprep.subr.mxu0 0.0
    %1615 = vmatpush1.msra.mxu0 0.0
    %1616 = vmatprep.subr.mxu0 0.0
    %1617 = vmatpush1.msra.mxu0 0.0
    %1618 = vmatprep.subr.mxu0 0.0
    %1619 = vmatpush1.msra.mxu0 0.0
    %1620 = vmatprep.subr.mxu0 0.0
    %1621 = vmatpush1.msra.mxu0 0.0
    %1622 = vmatprep.mubr.f32.mxu0 0.0
    %1623 = vmatmul.mubr.f32.gmra.mrb[0].mxu0 %v1547
    %v1624 = vpop.f32.mrb[0].mxu0
    %v1625 = vadd.f32 0.0, %v1624
    %v1626 = vpop.f32.mrb[0].mxu0
    %1627 = vmatprep.mubr.f32.mxu0 0.0
    %1628 = vmatmul.mubr.f32.gmra.mrb[0].mxu0 %v1550
    %v1629 = vpop.f32.mrb[0].mxu0
    %v1630 = vadd.f32 0.0, %v1629
    %v1631 = vpop.f32.mrb[0].mxu0
    %1632 = vmatprep.mubr.f32.mxu0 0.0
    %1633 = vmatmul.mubr.f32.gmra.mrb[0].mxu0 %v1553
    %v1634 = vpop.f32.mrb[0].mxu0
    %v1635 = vadd.f32 0.0, %v1634
    %v1636 = vpop.f32.mrb[0].mxu0
    %1637 = vmatprep.mubr.f32.mxu0 0.0
    %1638 = vmatmul.mubr.f32.gmra.mrb[0].mxu0 %v1556
    %v1639 = vpop.f32.mrb[0].mxu0
    %v1640 = vadd.f32 0.0, %v1639
    %v1641 = vpop.f32.mrb[0].mxu0
    %1642 = vdwg.mxu0
    %v1644 = vsel %vm441, %v1294, 0
    %v1647 = vsel %vm441, %v1299, 0
    %v1650 = vsel %vm441, %v1304, 0
    %v1653 = vsel %vm441, %v1309, 0
    %1655 = vmatprep.subr.mxu0 0.0
    %1656 = vmatpush1.msra.mxu0 %v1534
    %1657 = vmatprep.subr.mxu0 0.0
    %1658 = vmatpush1.msra.mxu0 %v1535
    %1659 = vmatprep.subr.mxu0 0.0
    %1660 = vmatpush1.msra.mxu0 %v1536
    %1661 = vmatprep.subr.mxu0 0.0
    %1662 = vmatpush1.msra.mxu0 %v1537
    %1663 = vmatprep.subr.mxu0 0.0
    %1664 = vmatpush1.msra.mxu0 0.0
    %1665 = vmatprep.subr.mxu0 0.0
    %1666 = vmatpush1.msra.mxu0 0.0
    %1667 = vmatprep.subr.mxu0 0.0
    %1668 = vmatpush1.msra.mxu0 0.0
    %1669 = vmatprep.subr.mxu0 0.0
    %1670 = vmatpush1.msra.mxu0 0.0
    %1671 = vmatprep.subr.mxu0 0.0
    %1672 = vmatpush1.msra.mxu0 0.0
    %1673 = vmatprep.subr.mxu0 0.0
    %1674 = vmatpush1.msra.mxu0 0.0
    %1675 = vmatprep.subr.mxu0 0.0
    %1676 = vmatpush1.msra.mxu0 0.0
    %1677 = vmatprep.subr.mxu0 0.0
    %1678 = vmatpush1.msra.mxu0 0.0
    %1679 = vmatprep.subr.mxu0 0.0
    %1680 = vmatpush1.msra.mxu0 0.0
    %1681 = vmatprep.subr.mxu0 0.0
    %1682 = vmatpush1.msra.mxu0 0.0
    %1683 = vmatprep.subr.mxu0 0.0
    %1684 = vmatpush1.msra.mxu0 0.0
    %1685 = vmatprep.subr.mxu0 0.0
    %1686 = vmatpush1.msra.mxu0 0.0
    %1687 = vmatprep.subr.mxu0 0.0
    %1688 = vmatpush1.msra.mxu0 0.0
    %1689 = vmatprep.subr.mxu0 0.0
    %1690 = vmatpush1.msra.mxu0 0.0
    %1691 = vmatprep.subr.mxu0 0.0
    %1692 = vmatpush1.msra.mxu0 0.0
    %1693 = vmatprep.subr.mxu0 0.0
    %1694 = vmatpush1.msra.mxu0 0.0
    %1695 = vmatprep.subr.mxu0 0.0
    %1696 = vmatpush1.msra.mxu0 0.0
    %1697 = vmatprep.subr.mxu0 0.0
    %1698 = vmatpush1.msra.mxu0 0.0
    %1699 = vmatprep.subr.mxu0 0.0
    %1700 = vmatpush1.msra.mxu0 0.0
    %1701 = vmatprep.subr.mxu0 0.0
    %1702 = vmatpush1.msra.mxu0 0.0
    %1703 = vmatprep.subr.mxu0 0.0
    %1704 = vmatpush1.msra.mxu0 0.0
    %1705 = vmatprep.subr.mxu0 0.0
    %1706 = vmatpush1.msra.mxu0 0.0
    %1707 = vmatprep.subr.mxu0 0.0
    %1708 = vmatpush1.msra.mxu0 0.0
    %1709 = vmatprep.subr.mxu0 0.0
    %1710 = vmatpush1.msra.mxu0 0.0
    %1711 = vmatprep.subr.mxu0 0.0
    %1712 = vmatpush1.msra.mxu0 0.0
    %1713 = vmatprep.subr.mxu0 0.0
    %1714 = vmatpush1.msra.mxu0 0.0
    %1715 = vmatprep.subr.mxu0 0.0
    %1716 = vmatpush1.msra.mxu0 0.0
    %1717 = vmatprep.subr.mxu0 0.0
    %1718 = vmatpush1.msra.mxu0 0.0
    %1719 = vmatprep.mubr.f32.mxu0 0.0
    %1720 = vmatmul.mubr.f32.gmra.mrb[0].mxu0 %v1644
    %v1721 = vpop.f32.mrb[0].mxu0
    %v1722 = vadd.f32 0.0, %v1721
    %v1723 = vpop.f32.mrb[0].mxu0
    %1724 = vmatprep.mubr.f32.mxu0 0.0
    %1725 = vmatmul.mubr.f32.gmra.mrb[0].mxu0 %v1647
    %v1726 = vpop.f32.mrb[0].mxu0
    %v1727 = vadd.f32 0.0, %v1726
    %v1728 = vpop.f32.mrb[0].mxu0
    %1729 = vmatprep.mubr.f32.mxu0 0.0
    %1730 = vmatmul.mubr.f32.gmra.mrb[0].mxu0 %v1650
    %v1731 = vpop.f32.mrb[0].mxu0
    %v1732 = vadd.f32 0.0, %v1731
    %v1733 = vpop.f32.mrb[0].mxu0
    %1734 = vmatprep.mubr.f32.mxu0 0.0
    %1735 = vmatmul.mubr.f32.gmra.mrb[0].mxu0 %v1653
    %v1736 = vpop.f32.mrb[0].mxu0
    %v1737 = vadd.f32 0.0, %v1736
    %v1738 = vpop.f32.mrb[0].mxu0
    %1739 = vdwg.mxu0
    %v1741 = vsel %vm441, %v1403, 0
    %v1744 = vsel %vm441, %v1408, 0
    %v1747 = vsel %vm441, %v1413, 0
    %v1750 = vsel %vm441, %v1418, 0
    %1752 = vmatprep.subr.mxu0 0.0
    %1753 = vmatpush1.msra.mxu0 %v1538
    %1754 = vmatprep.subr.mxu0 0.0
    %1755 = vmatpush1.msra.mxu0 %v1539
    %1756 = vmatprep.subr.mxu0 0.0
    %1757 = vmatpush1.msra.mxu0 %v1540
    %1758 = vmatprep.subr.mxu0 0.0
    %1759 = vmatpush1.msra.mxu0 %v1541
    %1760 = vmatprep.subr.mxu0 0.0
    %1761 = vmatpush1.msra.mxu0 0.0
    %1762 = vmatprep.subr.mxu0 0.0
    %1763 = vmatpush1.msra.mxu0 0.0
    %1764 = vmatprep.subr.mxu0 0.0
    %1765 = vmatpush1.msra.mxu0 0.0
    %1766 = vmatprep.subr.mxu0 0.0
    %1767 = vmatpush1.msra.mxu0 0.0
    %1768 = vmatprep.subr.mxu0 0.0
    %1769 = vmatpush1.msra.mxu0 0.0
    %1770 = vmatprep.subr.mxu0 0.0
    %1771 = vmatpush1.msra.mxu0 0.0
    %1772 = vmatprep.subr.mxu0 0.0
    %1773 = vmatpush1.msra.mxu0 0.0
    %1774 = vmatprep.subr.mxu0 0.0
    %1775 = vmatpush1.msra.mxu0 0.0
    %1776 = vmatprep.subr.mxu0 0.0
    %1777 = vmatpush1.msra.mxu0 0.0
    %1778 = vmatprep.subr.mxu0 0.0
    %1779 = vmatpush1.msra.mxu0 0.0
    %1780 = vmatprep.subr.mxu0 0.0
    %1781 = vmatpush1.msra.mxu0 0.0
    %1782 = vmatprep.subr.mxu0 0.0
    %1783 = vmatpush1.msra.mxu0 0.0
    %1784 = vmatprep.subr.mxu0 0.0
    %1785 = vmatpush1.msra.mxu0 0.0
    %1786 = vmatprep.subr.mxu0 0.0
    %1787 = vmatpush1.msra.mxu0 0.0
    %1788 = vmatprep.subr.mxu0 0.0
    %1789 = vmatpush1.msra.mxu0 0.0
    %1790 = vmatprep.subr.mxu0 0.0
    %1791 = vmatpush1.msra.mxu0 0.0
    %1792 = vmatprep.subr.mxu0 0.0
    %1793 = vmatpush1.msra.mxu0 0.0
    %1794 = vmatprep.subr.mxu0 0.0
    %1795 = vmatpush1.msra.mxu0 0.0
    %1796 = vmatprep.subr.mxu0 0.0
    %1797 = vmatpush1.msra.mxu0 0.0
    %1798 = vmatprep.subr.mxu0 0.0
    %1799 = vmatpush1.msra.mxu0 0.0
    %1800 = vmatprep.subr.mxu0 0.0
    %1801 = vmatpush1.msra.mxu0 0.0
    %1802 = vmatprep.subr.mxu0 0.0
    %1803 = vmatpush1.msra.mxu0 0.0
    %1804 = vmatprep.subr.mxu0 0.0
    %1805 = vmatpush1.msra.mxu0 0.0
    %1806 = vmatprep.subr.mxu0 0.0
    %1807 = vmatpush1.msra.mxu0 0.0
    %1808 = vmatprep.subr.mxu0 0.0
    %1809 = vmatpush1.msra.mxu0 0.0
    %1810 = vmatprep.subr.mxu0 0.0
    %1811 = vmatpush1.msra.mxu0 0.0
    %1812 = vmatprep.subr.mxu0 0.0
    %1813 = vmatpush1.msra.mxu0 0.0
    %1814 = vmatprep.subr.mxu0 0.0
    %1815 = vmatpush1.msra.mxu0 0.0
    %1816 = vmatprep.mubr.f32.mxu0 0.0
    %1817 = vmatmul.mubr.f32.gmra.mrb[0].mxu0 %v1741
    %v1818 = vpop.f32.mrb[0].mxu0
    %v1819 = vadd.f32 0.0, %v1818
    %v1820 = vpop.f32.mrb[0].mxu0
    %1821 = vmatprep.mubr.f32.mxu0 0.0
    %1822 = vmatmul.mubr.f32.gmra.mrb[0].mxu0 %v1744
    %v1823 = vpop.f32.mrb[0].mxu0
    %v1824 = vadd.f32 0.0, %v1823
    %v1825 = vpop.f32.mrb[0].mxu0
    %1826 = vmatprep.mubr.f32.mxu0 0.0
    %1827 = vmatmul.mubr.f32.gmra.mrb[0].mxu0 %v1747
    %v1828 = vpop.f32.mrb[0].mxu0
    %v1829 = vadd.f32 0.0, %v1828
    %v1830 = vpop.f32.mrb[0].mxu0
    %1831 = vmatprep.mubr.f32.mxu0 0.0
    %1832 = vmatmul.mubr.f32.gmra.mrb[0].mxu0 %v1750
    %v1833 = vpop.f32.mrb[0].mxu0
    %v1834 = vadd.f32 0.0, %v1833
    %v1835 = vpop.f32.mrb[0].mxu0
    %1836 = vdwg.mxu0
    %v1838 = vsel %vm441, %v1512, 0
    %v1841 = vsel %vm441, %v1517, 0
    %v1844 = vsel %vm441, %v1522, 0
    %v1847 = vsel %vm441, %v1527, 0
    %1849 = vmatprep.subr.mxu0 0.0
    %1850 = vmatpush1.msra.mxu0 %v1542
    %1851 = vmatprep.subr.mxu0 0.0
    %1852 = vmatpush1.msra.mxu0 %v1543
    %1853 = vmatprep.subr.mxu0 0.0
    %1854 = vmatpush1.msra.mxu0 %v1544
    %1855 = vmatprep.subr.mxu0 0.0
    %1856 = vmatpush1.msra.mxu0 %v1545
    %1857 = vmatprep.subr.mxu0 0.0
    %1858 = vmatpush1.msra.mxu0 0.0
    %1859 = vmatprep.subr.mxu0 0.0
    %1860 = vmatpush1.msra.mxu0 0.0
    %1861 = vmatprep.subr.mxu0 0.0
    %1862 = vmatpush1.msra.mxu0 0.0
    %1863 = vmatprep.subr.mxu0 0.0
    %1864 = vmatpush1.msra.mxu0 0.0
    %1865 = vmatprep.subr.mxu0 0.0
    %1866 = vmatpush1.msra.mxu0 0.0
    %1867 = vmatprep.subr.mxu0 0.0
    %1868 = vmatpush1.msra.mxu0 0.0
    %1869 = vmatprep.subr.mxu0 0.0
    %1870 = vmatpush1.msra.mxu0 0.0
    %1871 = vmatprep.subr.mxu0 0.0
    %1872 = vmatpush1.msra.mxu0 0.0
    %1873 = vmatprep.subr.mxu0 0.0
    %1874 = vmatpush1.msra.mxu0 0.0
    %1875 = vmatprep.subr.mxu0 0.0
    %1876 = vmatpush1.msra.mxu0 0.0
    %1877 = vmatprep.subr.mxu0 0.0
    %1878 = vmatpush1.msra.mxu0 0.0
    %1879 = vmatprep.subr.mxu0 0.0
    %1880 = vmatpush1.msra.mxu0 0.0
    %1881 = vmatprep.subr.mxu0 0.0
    %1882 = vmatpush1.msra.mxu0 0.0
    %1883 = vmatprep.subr.mxu0 0.0
    %1884 = vmatpush1.msra.mxu0 0.0
    %1885 = vmatprep.subr.mxu0 0.0
    %1886 = vmatpush1.msra.mxu0 0.0
    %1887 = vmatprep.subr.mxu0 0.0
    %1888 = vmatpush1.msra.mxu0 0.0
    %1889 = vmatprep.subr.mxu0 0.0
    %1890 = vmatpush1.msra.mxu0 0.0
    %1891 = vmatprep.subr.mxu0 0.0
    %1892 = vmatpush1.msra.mxu0 0.0
    %1893 = vmatprep.subr.mxu0 0.0
    %1894 = vmatpush1.msra.mxu0 0.0
    %1895 = vmatprep.subr.mxu0 0.0
    %1896 = vmatpush1.msra.mxu0 0.0
    %1897 = vmatprep.subr.mxu0 0.0
    %1898 = vmatpush1.msra.mxu0 0.0
    %1899 = vmatprep.subr.mxu0 0.0
    %1900 = vmatpush1.msra.mxu0 0.0
    %1901 = vmatprep.subr.mxu0 0.0
    %1902 = vmatpush1.msra.mxu0 0.0
    %1903 = vmatprep.subr.mxu0 0.0
    %1904 = vmatpush1.msra.mxu0 0.0
    %1905 = vmatprep.subr.mxu0 0.0
    %1906 = vmatpush1.msra.mxu0 0.0
    %1907 = vmatprep.subr.mxu0 0.0
    %1908 = vmatpush1.msra.mxu0 0.0
    %1909 = vmatprep.subr.mxu0 0.0
    %1910 = vmatpush1.msra.mxu0 0.0
    %1911 = vmatprep.subr.mxu0 0.0
    %1912 = vmatpush1.msra.mxu0 0.0
    %1913 = vmatprep.mubr.f32.mxu0 0.0
    %1914 = vmatmul.mubr.f32.gmra.mrb[0].mxu0 %v1838
    %v1915 = vpop.f32.mrb[0].mxu0
    %v1916 = vadd.f32 0.0, %v1915
    %v1917 = vpop.f32.mrb[0].mxu0
    %1918 = vmatprep.mubr.f32.mxu0 0.0
    %1919 = vmatmul.mubr.f32.gmra.mrb[0].mxu0 %v1841
    %v1920 = vpop.f32.mrb[0].mxu0
    %v1921 = vadd.f32 0.0, %v1920
    %v1922 = vpop.f32.mrb[0].mxu0
    %1923 = vmatprep.mubr.f32.mxu0 0.0
    %1924 = vmatmul.mubr.f32.gmra.mrb[0].mxu0 %v1844
    %v1925 = vpop.f32.mrb[0].mxu0
    %v1926 = vadd.f32 0.0, %v1925
    %v1927 = vpop.f32.mrb[0].mxu0
    %1928 = vmatprep.mubr.f32.mxu0 0.0
    %1929 = vmatmul.mubr.f32.gmra.mrb[0].mxu0 %v1847
    %v1930 = vpop.f32.mrb[0].mxu0
    %v1931 = vadd.f32 0.0, %v1930
    %v1932 = vpop.f32.mrb[0].mxu0
    %1933 = vdwg.mxu0
    %v1934 = vadd.f32 %v1625, %v1722
    %v1935 = vadd.f32 %v1934, %v1819
    %v1936 = vadd.f32 %v1935, %v1916
    %v1937 = vadd.f32 %v1630, %v1727
    %v1938 = vadd.f32 %v1937, %v1824
    %v1939 = vadd.f32 %v1938, %v1921
    %v1940 = vadd.f32 %v1635, %v1732
    %v1941 = vadd.f32 %v1940, %v1829
    %v1942 = vadd.f32 %v1941, %v1926
    %v1943 = vadd.f32 %v1640, %v1737
    %v1944 = vadd.f32 %v1943, %v1834
    %v1945 = vadd.f32 %v1944, %v1931
    %v1946 = vld [vmem:[%s3] sm:$0x1]
    %v1948 = vlaneseq
    %v1949 = vshrl.u32 %v1948, 7
    %v1950 = vsub.s32 0, %v1949
    %v1951 = vrot.slane %v1946, %v1950
    %v1953 = vadd.f32 %v1936, %v1951
    %v1954 = vadd.f32 %v1939, %v1951
    %v1955 = vadd.f32 %v1942, %v1951
    %v1956 = vadd.f32 %v1945, %v1951
    %1957 = vst [vmem:[#allocation2] sm:$0xff] %v1953
    %1958 = vst [vmem:[#allocation2 + $0x8] sm:$0xff] %v1954
    %1959 = vst [vmem:[#allocation2 + $0x10] sm:$0xff] %v1955
    %1960 = vst [vmem:[#allocation2 + $0x18] sm:$0xff] %v1956
    // Predicated region
    $region22: #{tpu_custom_call.1} parent=1 // pred_check
      _
    $region23: #{tpu_custom_call.1} parent=1 // pred_check_branch
      %1962 = sbr.rel (0) target = $region25
    $region24: #{tpu_custom_call.1} parent=1 // pred_region
      %s1964 = ssub.s32 512, 512
      %1965 = vsyncadd [#allocation3], %s1964
      %s1966 = sshll.u32 [#allocation2], 4
      %s1967 = int_to_ptr.vmem [resolvable:$true] %s1966
      %1972 = dma.vmem_to_hbm [thread:$0]  %s1967, 512, %s5, [#allocation3], 128, 128, 8
    $region25: #{tpu_custom_call.1} parent=1 // pred_fallthru
      _
    // Predicated region
    $region26: #{tpu_custom_call.1} parent=1 // pred_check
      _
    $region27: #{tpu_custom_call.1} parent=1 // pred_check_branch
      %1974 = sbr.rel (0) target = $region29
    $region28: #{tpu_custom_call.1} parent=1 // pred_region
      %1975 = dma.done [#allocation3], 512
    $region29: #{tpu_custom_call.1} parent=1 // pred_fallthru
      _
    %1976 = vsyncpa [#allocation3], 1

</llo_original>
